<compile_context>
chip_gen: v6e
topology: v6e:2x2x1
jax: 0.10.0
libtpu: 0.0.40
codegen_flags: <defaults>
</compile_context>

<pallas_src>
import functools

import jax
import jax.numpy as jnp
from jax.experimental import pallas as pl
from jax.experimental.pallas import tpu as pltpu


def _round_up(x, m):
    return ((x + m - 1) // m) * m


def _ctrnn_seq_kernel(ih_ref, wh_ref, bh_ref, out_ref, h_last_ref,
                      h_sc, th_sc, *, tau, t_block, seq_len):
    """One grid step == T_BLOCK time steps of the CTRNN recurrence.

    ih_ref    : VMEM (T, Bp, Hp)      pre-projected i2h(x) for this time block
    wh_ref    : VMEM (Hp, Hp)         h2h weight (pre-transposed), VMEM-resident
    bh_ref    : VMEM (1, Hp)          h2h bias, VMEM-resident
    out_ref   : VMEM (T, Bp, Hp)      tanh(h) for this time block
    h_last_ref: VMEM (Bp, Hp)         final pre-activation hidden state (resident)
    h_sc      : VMEM scratch (Bp, Hp) carried pre-activation hidden state
    th_sc     : VMEM scratch (Bp, Hp) carried tanh(hidden state)
    """
    blk = pl.program_id(0)
    inv_tau = jnp.float32(1.0 / tau)

    def step(i, carry):
        t_glob = blk * t_block + i

        # Guard against the zero-padded tail of the (possibly padded) sequence.
        @pl.when(t_glob < seq_len)
        def _():
            ih = ih_ref[i]                                     # (Bp, Hp)

            @pl.when(t_glob == 0)
            def _():
                # PyTorch "self.h is None" branch: h_new = i2h(x)
                h_sc[...] = ih

            @pl.when(t_glob > 0)
            def _():
                # h2h(tanh(h)): tanh is reused from the previous step (th_sc).
                hh = jnp.dot(th_sc[...], wh_ref[...],
                             preferred_element_type=jnp.float32) + bh_ref[...]
                # h = (1 - 1/tau)*h + (1/tau)*(ih + hh)  ==  h + (1/tau)*((ih+hh) - h)
                h_sc[...] += inv_tau * ((ih + hh) - h_sc[...])

            th = jnp.tanh(h_sc[...])                           # gain = 1.0
            th_sc[...] = th                                    # feeds the next step
            out_ref[i] = th

            # Write the final state exactly once, at the last real timestep.
            @pl.when(t_glob == seq_len - 1)
            def _():
                h_last_ref[...] = h_sc[...]

        return carry

    jax.lax.fori_loop(0, t_block, step, None, unroll=True)


def ctrnn_forward_sequence(xs, params, tau, t_block=None):
    """Run the CTRNN cell over a full sequence in one pallas_call.

    xs: (seq, B, n_in) f32
    params: wi_t (n_in, n_hid), bi (n_hid,), wh_t (n_hid, n_hid), bh (n_hid,)
    Returns (h_out_all (seq, B, n_hid), h_final (B, n_hid)).
    """
    seq, B, n_in = xs.shape
    n_hid = params["wi_t"].shape[1]

    # Sublane-full batch, lane-dense hidden width.
    Bp = _round_up(max(B, 8), 8)
    Hp = _round_up(max(n_hid, 128), 128)

    # Time-block size: amortize per-grid-step overhead over several steps.
    if t_block is None:
        t_block = min(seq, 8)
    n_blocks = pl.cdiv(seq, t_block)
    seq_p = n_blocks * t_block

    # --- Hoisted i2h projection: one large batched matmul, off the serial path.
    ih_all = xs.reshape(seq * B, n_in) @ params["wi_t"] + params["bi"]
    ih_all = ih_all.reshape(seq, B, n_hid)

    # Pad only when needed (skip pad/slice round trips on aligned shapes).
    if (seq_p, Bp, Hp) != (seq, B, n_hid):
        ih_all = jnp.pad(
            ih_all, ((0, seq_p - seq), (0, Bp - B), (0, Hp - n_hid)))
    wh_p = params["wh_t"]
    bh_p = params["bh"]
    if Hp != n_hid:
        wh_p = jnp.pad(wh_p, ((0, Hp - n_hid), (0, Hp - n_hid)))
        bh_p = jnp.pad(bh_p, (0, Hp - n_hid))
    bh_p = bh_p.reshape(1, Hp)

    kernel = functools.partial(
        _ctrnn_seq_kernel, tau=float(tau), t_block=t_block, seq_len=seq)

    h_out_all, h_final = pl.pallas_call(
        kernel,
        out_shape=(
            jax.ShapeDtypeStruct((seq_p, Bp, Hp), jnp.float32),
            jax.ShapeDtypeStruct((Bp, Hp), jnp.float32),
        ),
        grid_spec=pltpu.PrefetchScalarGridSpec(
            num_scalar_prefetch=0,
            grid=(n_blocks,),
            in_specs=[
                pl.BlockSpec((t_block, Bp, Hp), lambda i: (i, 0, 0)),  # ih block
                pl.BlockSpec((Hp, Hp), lambda i: (0, 0)),              # wh (resident)
                pl.BlockSpec((1, Hp), lambda i: (0, 0)),               # bh (resident)
            ],
            out_specs=(
                pl.BlockSpec((t_block, Bp, Hp), lambda i: (i, 0, 0)),  # tanh(h) block
                pl.BlockSpec((Bp, Hp), lambda i: (0, 0)),              # final h (resident)
            ),
            scratch_shapes=[
                pltpu.VMEM((Bp, Hp), jnp.float32),                     # h (pre-activation)
                pltpu.VMEM((Bp, Hp), jnp.float32),                     # tanh(h)
            ],
        ),
        compiler_params=pltpu.CompilerParams(
            dimension_semantics=("arbitrary",),                        # true recurrence
        ),
    )(ih_all, wh_p, bh_p)

    # Slice off padding only if we padded.  (Consumers that accept the padded
    # layout can skip this extra HBM copy.)
    if (seq_p, Bp, Hp) != (seq, B, n_hid):
        h_out_all = h_out_all[:seq, :B, :n_hid]
        h_final = h_final[:B, :n_hid]
    return h_out_all, h_final


def ctrnn_forward_sequence_ref(xs, params, tau):
    """Pure-JAX reference mirroring the stateful PyTorch forward over a sequence."""
    h = None
    outs = []
    for t in range(xs.shape[0]):
        ih = xs[t] @ params["wi_t"] + params["bi"]
        if h is None:
            h_new = ih
        else:
            hh = jnp.tanh(h) @ params["wh_t"] + params["bh"]
            h_new = (1.0 - 1.0 / tau) * h + (1.0 / tau) * (ih + hh)
        h = h_new
        outs.append(jnp.tanh(h_new))
    return jnp.stack(outs), h


def init_params(key, n_in, n_hid):
    """Deterministic init mimicking nn.Linear (uniform +-1/sqrt(fan_in))."""
    k1, k2, k3, k4 = jax.random.split(key, 4)
    lim_i = 1.0 / jnp.sqrt(jnp.float32(n_in))
    lim_h = 1.0 / jnp.sqrt(jnp.float32(n_hid))
    return {
        # stored already transposed: (in, out)
        "wi_t": jax.random.uniform(k1, (n_in, n_hid), jnp.float32, -lim_i, lim_i),
        "bi": jax.random.uniform(k2, (n_hid,), jnp.float32, -lim_i, lim_i),
        "wh_t": jax.random.uniform(k3, (n_hid, n_hid), jnp.float32, -lim_h, lim_h),
        "bh": jax.random.uniform(k4, (n_hid,), jnp.float32, -lim_h, lim_h),
    }


if __name__ == "__main__":
    B, n_in, n_hid, seq = 2, 16, 32, 8
    tau = 2.0

    key = jax.random.PRNGKey(0)
    pkey, xkey = jax.random.split(key)
    params = init_params(pkey, n_in, n_hid)
    xs = jax.random.normal(xkey, (seq, B, n_in), jnp.float32)

    out, h_final = ctrnn_forward_sequence(xs, params, tau)
    out = jax.block_until_ready(out)
    h_final = jax.block_until_ready(h_final)

    out_ref, h_ref = ctrnn_forward_sequence_ref(xs, params, tau)

    assert out.shape == (seq, B, n_hid)
    assert h_final.shape == (B, n_hid)
    assert jnp.allclose(out, out_ref, atol=1e-4, rtol=1e-4), "output mismatch vs reference"
    assert jnp.allclose(h_final, h_ref, atol=1e-4, rtol=1e-4), "state mismatch vs reference"
    print("KERNEL_OK")
</pallas_src>

<mosaic_0001>
module attributes {stable_mosaic.version = 11 : i64} {
  func.func @_ctrnn_seq_kernel(%arg0: i32, %arg1: memref<8x8x128xf32, #tpu.memory_space<vmem>>, %arg2: memref<128x128xf32, #tpu.memory_space<vmem>>, %arg3: memref<1x128xf32, #tpu.memory_space<vmem>>, %arg4: memref<8x8x128xf32, #tpu.memory_space<vmem>>, %arg5: memref<8x128xf32, #tpu.memory_space<vmem>>, %arg6: memref<8x128xf32, #tpu.memory_space<vmem>>, %arg7: memref<8x128xf32, #tpu.memory_space<vmem>>) attributes {dimension_semantics = [#tpu.dimension_semantics<arbitrary>], iteration_bounds = array<i64: 1>, scalar_prefetch = 0 : i64, scratch_operands = 2 : i64, tpu.core_type = #tpu.core_type<tc>, window_params = [{transform_indices = @transform_0, window_bounds = array<i64: 8, 8, 128>}, {pipeline_mode = #tpu.pipeline_mode<synchronous>, transform_indices = @transform_1, window_bounds = array<i64: 128, 128>}, {pipeline_mode = #tpu.pipeline_mode<synchronous>, transform_indices = @transform_2, window_bounds = array<i64: 1, 128>}, {transform_indices = @transform_3, window_bounds = array<i64: 8, 8, 128>}, {pipeline_mode = #tpu.pipeline_mode<synchronous>, transform_indices = @transform_4, window_bounds = array<i64: 8, 128>}]} {
    %cst = arith.constant 5.000000e-01 : f32
    %c0_i32 = arith.constant 0 : i32
    %c8_i32 = arith.constant 8 : i32
    %0 = arith.muli %arg0, %c8_i32 : i32
    %1 = arith.addi %0, %c0_i32 : i32
    %c8_i32_0 = arith.constant 8 : i32
    %2 = arith.cmpi slt, %1, %c8_i32_0 : i32
    %3 = arith.extui %2 : i1 to i32
    %c0_i32_1 = arith.constant 0 : i32
    %4 = arith.cmpi ne, %3, %c0_i32_1 : i32
    scf.if %4 {
      %40 = arith.index_cast %c0_i32 : i32 to index
      %c0 = arith.constant 0 : index
      %c0_24 = arith.constant 0 : index
      %41 = vector.load %arg1[%40, %c0, %c0_24] : memref<8x8x128xf32, #tpu.memory_space<vmem>>, vector<1x8x128xf32>
      %42 = vector.shape_cast %41 : vector<1x8x128xf32> to vector<8x128xf32>
      %c0_i32_25 = arith.constant 0 : i32
      %43 = arith.cmpi eq, %1, %c0_i32_25 : i32
      %44 = arith.extui %43 : i1 to i32
      %c0_i32_26 = arith.constant 0 : i32
      %45 = arith.cmpi ne, %44, %c0_i32_26 : i32
      scf.if %45 {
        %c0_37 = arith.constant 0 : index
        %c0_38 = arith.constant 0 : index
        %59 = vector.load %arg6[%c0_37, %c0_38] : memref<8x128xf32, #tpu.memory_space<vmem>>, vector<8x128xf32>
        tpu.vector_store %arg6[%c0_37, %c0_38], %42 {strides = array<i32>} : memref<8x128xf32, #tpu.memory_space<vmem>>, vector<8x128xf32>,
      } else {
      }
      %c0_i32_27 = arith.constant 0 : i32
      %46 = arith.cmpi sgt, %1, %c0_i32_27 : i32
      %47 = arith.extui %46 : i1 to i32
      %c0_i32_28 = arith.constant 0 : i32
      %48 = arith.cmpi ne, %47, %c0_i32_28 : i32
      scf.if %48 {
        %c0_37 = arith.constant 0 : index
        %c0_38 = arith.constant 0 : index
        %59 = vector.load %arg7[%c0_37, %c0_38] : memref<8x128xf32, #tpu.memory_space<vmem>>, vector<8x128xf32>
        %c0_39 = arith.constant 0 : index
        %c0_40 = arith.constant 0 : index
        %60 = vector.load %arg2[%c0_39, %c0_40] : memref<128x128xf32, #tpu.memory_space<vmem>>, vector<128x128xf32>
        %cst_41 = arith.constant dense<0.000000e+00> : vector<8x128xf32>
        %61 = tpu.matmul %59, %60, %cst_41 {dimension_numbers = #tpu.dot_dimension_numbers<[1], [0], [0], [1], [0, 0, 1, 1], [], []>} : vector<8x128xf32>, vector<128x128xf32>, vector<8x128xf32> -> vector<8x128xf32>
        %c0_42 = arith.constant 0 : index
        %c0_43 = arith.constant 0 : index
        %62 = vector.load %arg3[%c0_42, %c0_43] : memref<1x128xf32, #tpu.memory_space<vmem>>, vector<1x128xf32>
        %63 = vector.broadcast %62 : vector<1x128xf32> to vector<8x128xf32>
        %64 = arith.addf %61, %63 : vector<8x128xf32>
        %c0_44 = arith.constant 0 : index
        %c0_45 = arith.constant 0 : index
        %65 = vector.load %arg6[%c0_44, %c0_45] : memref<8x128xf32, #tpu.memory_space<vmem>>, vector<8x128xf32>
        %66 = arith.addf %42, %64 : vector<8x128xf32>
        %c0_46 = arith.constant 0 : index
        %c0_47 = arith.constant 0 : index
        %67 = vector.load %arg6[%c0_46, %c0_47] : memref<8x128xf32, #tpu.memory_space<vmem>>, vector<8x128xf32>
        %68 = arith.subf %66, %67 : vector<8x128xf32>
        %69 = vector.broadcast %cst : f32 to vector<8x128xf32>
        %70 = arith.mulf %69, %68 : vector<8x128xf32>
        %71 = arith.addf %65, %70 : vector<8x128xf32>
        %c0_48 = arith.constant 0 : index
        %c0_49 = arith.constant 0 : index
        %72 = vector.load %arg6[%c0_48, %c0_49] : memref<8x128xf32, #tpu.memory_space<vmem>>, vector<8x128xf32>
        tpu.vector_store %arg6[%c0_48, %c0_49], %71 {strides = array<i32>} : memref<8x128xf32, #tpu.memory_space<vmem>>, vector<8x128xf32>,
      } else {
      }
      %c0_29 = arith.constant 0 : index
      %c0_30 = arith.constant 0 : index
      %49 = vector.load %arg6[%c0_29, %c0_30] : memref<8x128xf32, #tpu.memory_space<vmem>>, vector<8x128xf32>
      %50 = math.tanh %49 : vector<8x128xf32>
      %c0_31 = arith.constant 0 : index
      %c0_32 = arith.constant 0 : index
      %51 = vector.load %arg7[%c0_31, %c0_32] : memref<8x128xf32, #tpu.memory_space<vmem>>, vector<8x128xf32>
      tpu.vector_store %arg7[%c0_31, %c0_32], %50 {strides = array<i32>} : memref<8x128xf32, #tpu.memory_space<vmem>>, vector<8x128xf32>,
      %52 = arith.index_cast %c0_i32 : i32 to index
      %c0_33 = arith.constant 0 : index
      %c0_34 = arith.constant 0 : index
      %53 = vector.load %arg4[%52, %c0_33, %c0_34] : memref<8x8x128xf32, #tpu.memory_space<vmem>>, vector<1x8x128xf32>
      %54 = vector.shape_cast %53 : vector<1x8x128xf32> to vector<8x128xf32>
      %55 = vector.shape_cast %50 : vector<8x128xf32> to vector<1x8x128xf32>
      tpu.vector_store %arg4[%52, %c0_33, %c0_34], %55 {strides = array<i32>} : memref<8x8x128xf32, #tpu.memory_space<vmem>>, vector<1x8x128xf32>,
      %c7_i32_35 = arith.constant 7 : i32
      %56 = arith.cmpi eq, %1, %c7_i32_35 : i32
      %57 = arith.extui %56 : i1 to i32
      %c0_i32_36 = arith.constant 0 : i32
      %58 = arith.cmpi ne, %57, %c0_i32_36 : i32
      scf.if %58 {
        %c0_37 = arith.constant 0 : index
        %c0_38 = arith.constant 0 : index
        %59 = vector.load %arg6[%c0_37, %c0_38] : memref<8x128xf32, #tpu.memory_space<vmem>>, vector<8x128xf32>
        %c0_39 = arith.constant 0 : index
        %c0_40 = arith.constant 0 : index
        %60 = vector.load %arg5[%c0_39, %c0_40] : memref<8x128xf32, #tpu.memory_space<vmem>>, vector<8x128xf32>
        tpu.vector_store %arg5[%c0_39, %c0_40], %59 {strides = array<i32>} : memref<8x128xf32, #tpu.memory_space<vmem>>, vector<8x128xf32>,
      } else {
      }
    } else {
    }
    %c1_i32 = arith.constant 1 : i32
    %c8_i32_2 = arith.constant 8 : i32
    %5 = arith.muli %arg0, %c8_i32_2 : i32
    %6 = arith.addi %5, %c1_i32 : i32
    %c8_i32_3 = arith.constant 8 : i32
    %7 = arith.cmpi slt, %6, %c8_i32_3 : i32
    %8 = arith.extui %7 : i1 to i32
    %c0_i32_4 = arith.constant 0 : i32
    %9 = arith.cmpi ne, %8, %c0_i32_4 : i32
    scf.if %9 {
      %40 = arith.index_cast %c1_i32 : i32 to index
      %c0 = arith.constant 0 : index
      %c0_24 = arith.constant 0 : index
      %41 = vector.load %arg1[%40, %c0, %c0_24] : memref<8x8x128xf32, #tpu.memory_space<vmem>>, vector<1x8x128xf32>
      %42 = vector.shape_cast %41 : vector<1x8x128xf32> to vector<8x128xf32>
      %c0_i32_25 = arith.constant 0 : i32
      %43 = arith.cmpi eq, %6, %c0_i32_25 : i32
      %44 = arith.extui %43 : i1 to i32
      %c0_i32_26 = arith.constant 0 : i32
      %45 = arith.cmpi ne, %44, %c0_i32_26 : i32
      scf.if %45 {
        %c0_37 = arith.constant 0 : index
        %c0_38 = arith.constant 0 : index
        %59 = vector.load %arg6[%c0_37, %c0_38] : memref<8x128xf32, #tpu.memory_space<vmem>>, vector<8x128xf32>
        tpu.vector_store %arg6[%c0_37, %c0_38], %42 {strides = array<i32>} : memref<8x128xf32, #tpu.memory_space<vmem>>, vector<8x128xf32>,
      } else {
      }
      %c0_i32_27 = arith.constant 0 : i32
      %46 = arith.cmpi sgt, %6, %c0_i32_27 : i32
      %47 = arith.extui %46 : i1 to i32
      %c0_i32_28 = arith.constant 0 : i32
      %48 = arith.cmpi ne, %47, %c0_i32_28 : i32
      scf.if %48 {
        %c0_37 = arith.constant 0 : index
        %c0_38 = arith.constant 0 : index
        %59 = vector.load %arg7[%c0_37, %c0_38] : memref<8x128xf32, #tpu.memory_space<vmem>>, vector<8x128xf32>
        %c0_39 = arith.constant 0 : index
        %c0_40 = arith.constant 0 : index
        %60 = vector.load %arg2[%c0_39, %c0_40] : memref<128x128xf32, #tpu.memory_space<vmem>>, vector<128x128xf32>
        %cst_41 = arith.constant dense<0.000000e+00> : vector<8x128xf32>
        %61 = tpu.matmul %59, %60, %cst_41 {dimension_numbers = #tpu.dot_dimension_numbers<[1], [0], [0], [1], [0, 0, 1, 1], [], []>} : vector<8x128xf32>, vector<128x128xf32>, vector<8x128xf32> -> vector<8x128xf32>
        %c0_42 = arith.constant 0 : index
        %c0_43 = arith.constant 0 : index
        %62 = vector.load %arg3[%c0_42, %c0_43] : memref<1x128xf32, #tpu.memory_space<vmem>>, vector<1x128xf32>
        %63 = vector.broadcast %62 : vector<1x128xf32> to vector<8x128xf32>
        %64 = arith.addf %61, %63 : vector<8x128xf32>
        %c0_44 = arith.constant 0 : index
        %c0_45 = arith.constant 0 : index
        %65 = vector.load %arg6[%c0_44, %c0_45] : memref<8x128xf32, #tpu.memory_space<vmem>>, vector<8x128xf32>
        %66 = arith.addf %42, %64 : vector<8x128xf32>
        %c0_46 = arith.constant 0 : index
        %c0_47 = arith.constant 0 : index
        %67 = vector.load %arg6[%c0_46, %c0_47] : memref<8x128xf32, #tpu.memory_space<vmem>>, vector<8x128xf32>
        %68 = arith.subf %66, %67 : vector<8x128xf32>
        %69 = vector.broadcast %cst : f32 to vector<8x128xf32>
        %70 = arith.mulf %69, %68 : vector<8x128xf32>
        %71 = arith.addf %65, %70 : vector<8x128xf32>
        %c0_48 = arith.constant 0 : index
        %c0_49 = arith.constant 0 : index
        %72 = vector.load %arg6[%c0_48, %c0_49] : memref<8x128xf32, #tpu.memory_space<vmem>>, vector<8x128xf32>
        tpu.vector_store %arg6[%c0_48, %c0_49], %71 {strides = array<i32>} : memref<8x128xf32, #tpu.memory_space<vmem>>, vector<8x128xf32>,
      } else {
      }
      %c0_29 = arith.constant 0 : index
      %c0_30 = arith.constant 0 : index
      %49 = vector.load %arg6[%c0_29, %c0_30] : memref<8x128xf32, #tpu.memory_space<vmem>>, vector<8x128xf32>
      %50 = math.tanh %49 : vector<8x128xf32>
      %c0_31 = arith.constant 0 : index
      %c0_32 = arith.constant 0 : index
      %51 = vector.load %arg7[%c0_31, %c0_32] : memref<8x128xf32, #tpu.memory_space<vmem>>, vector<8x128xf32>
      tpu.vector_store %arg7[%c0_31, %c0_32], %50 {strides = array<i32>} : memref<8x128xf32, #tpu.memory_space<vmem>>, vector<8x128xf32>,
      %52 = arith.index_cast %c1_i32 : i32 to index
      %c0_33 = arith.constant 0 : index
      %c0_34 = arith.constant 0 : index
      %53 = vector.load %arg4[%52, %c0_33, %c0_34] : memref<8x8x128xf32, #tpu.memory_space<vmem>>, vector<1x8x128xf32>
      %54 = vector.shape_cast %53 : vector<1x8x128xf32> to vector<8x128xf32>
      %55 = vector.shape_cast %50 : vector<8x128xf32> to vector<1x8x128xf32>
      tpu.vector_store %arg4[%52, %c0_33, %c0_34], %55 {strides = array<i32>} : memref<8x8x128xf32, #tpu.memory_space<vmem>>, vector<1x8x128xf32>,
      %c7_i32_35 = arith.constant 7 : i32
      %56 = arith.cmpi eq, %6, %c7_i32_35 : i32
      %57 = arith.extui %56 : i1 to i32
      %c0_i32_36 = arith.constant 0 : i32
      %58 = arith.cmpi ne, %57, %c0_i32_36 : i32
      scf.if %58 {
        %c0_37 = arith.constant 0 : index
        %c0_38 = arith.constant 0 : index
        %59 = vector.load %arg6[%c0_37, %c0_38] : memref<8x128xf32, #tpu.memory_space<vmem>>, vector<8x128xf32>
        %c0_39 = arith.constant 0 : index
        %c0_40 = arith.constant 0 : index
        %60 = vector.load %arg5[%c0_39, %c0_40] : memref<8x128xf32, #tpu.memory_space<vmem>>, vector<8x128xf32>
        tpu.vector_store %arg5[%c0_39, %c0_40], %59 {strides = array<i32>} : memref<8x128xf32, #tpu.memory_space<vmem>>, vector<8x128xf32>,
      } else {
      }
    } else {
    }
    %c2_i32 = arith.constant 2 : i32
    %c8_i32_5 = arith.constant 8 : i32
    %10 = arith.muli %arg0, %c8_i32_5 : i32
    %11 = arith.addi %10, %c2_i32 : i32
    %c8_i32_6 = arith.constant 8 : i32
    %12 = arith.cmpi slt, %11, %c8_i32_6 : i32
    %13 = arith.extui %12 : i1 to i32
    %c0_i32_7 = arith.constant 0 : i32
    %14 = arith.cmpi ne, %13, %c0_i32_7 : i32
    scf.if %14 {
      %40 = arith.index_cast %c2_i32 : i32 to index
      %c0 = arith.constant 0 : index
      %c0_24 = arith.constant 0 : index
      %41 = vector.load %arg1[%40, %c0, %c0_24] : memref<8x8x128xf32, #tpu.memory_space<vmem>>, vector<1x8x128xf32>
      %42 = vector.shape_cast %41 : vector<1x8x128xf32> to vector<8x128xf32>
      %c0_i32_25 = arith.constant 0 : i32
      %43 = arith.cmpi eq, %11, %c0_i32_25 : i32
      %44 = arith.extui %43 : i1 to i32
      %c0_i32_26 = arith.constant 0 : i32
      %45 = arith.cmpi ne, %44, %c0_i32_26 : i32
      scf.if %45 {
        %c0_37 = arith.constant 0 : index
        %c0_38 = arith.constant 0 : index
        %59 = vector.load %arg6[%c0_37, %c0_38] : memref<8x128xf32, #tpu.memory_space<vmem>>, vector<8x128xf32>
        tpu.vector_store %arg6[%c0_37, %c0_38], %42 {strides = array<i32>} : memref<8x128xf32, #tpu.memory_space<vmem>>, vector<8x128xf32>,
      } else {
      }
      %c0_i32_27 = arith.constant 0 : i32
      %46 = arith.cmpi sgt, %11, %c0_i32_27 : i32
      %47 = arith.extui %46 : i1 to i32
      %c0_i32_28 = arith.constant 0 : i32
      %48 = arith.cmpi ne, %47, %c0_i32_28 : i32
      scf.if %48 {
        %c0_37 = arith.constant 0 : index
        %c0_38 = arith.constant 0 : index
        %59 = vector.load %arg7[%c0_37, %c0_38] : memref<8x128xf32, #tpu.memory_space<vmem>>, vector<8x128xf32>
        %c0_39 = arith.constant 0 : index
        %c0_40 = arith.constant 0 : index
        %60 = vector.load %arg2[%c0_39, %c0_40] : memref<128x128xf32, #tpu.memory_space<vmem>>, vector<128x128xf32>
        %cst_41 = arith.constant dense<0.000000e+00> : vector<8x128xf32>
        %61 = tpu.matmul %59, %60, %cst_41 {dimension_numbers = #tpu.dot_dimension_numbers<[1], [0], [0], [1], [0, 0, 1, 1], [], []>} : vector<8x128xf32>, vector<128x128xf32>, vector<8x128xf32> -> vector<8x128xf32>
        %c0_42 = arith.constant 0 : index
        %c0_43 = arith.constant 0 : index
        %62 = vector.load %arg3[%c0_42, %c0_43] : memref<1x128xf32, #tpu.memory_space<vmem>>, vector<1x128xf32>
        %63 = vector.broadcast %62 : vector<1x128xf32> to vector<8x128xf32>
        %64 = arith.addf %61, %63 : vector<8x128xf32>
        %c0_44 = arith.constant 0 : index
        %c0_45 = arith.constant 0 : index
        %65 = vector.load %arg6[%c0_44, %c0_45] : memref<8x128xf32, #tpu.memory_space<vmem>>, vector<8x128xf32>
        %66 = arith.addf %42, %64 : vector<8x128xf32>
        %c0_46 = arith.constant 0 : index
        %c0_47 = arith.constant 0 : index
        %67 = vector.load %arg6[%c0_46, %c0_47] : memref<8x128xf32, #tpu.memory_space<vmem>>, vector<8x128xf32>
        %68 = arith.subf %66, %67 : vector<8x128xf32>
        %69 = vector.broadcast %cst : f32 to vector<8x128xf32>
        %70 = arith.mulf %69, %68 : vector<8x128xf32>
        %71 = arith.addf %65, %70 : vector<8x128xf32>
        %c0_48 = arith.constant 0 : index
        %c0_49 = arith.constant 0 : index
        %72 = vector.load %arg6[%c0_48, %c0_49] : memref<8x128xf32, #tpu.memory_space<vmem>>, vector<8x128xf32>
        tpu.vector_store %arg6[%c0_48, %c0_49], %71 {strides = array<i32>} : memref<8x128xf32, #tpu.memory_space<vmem>>, vector<8x128xf32>,
      } else {
      }
      %c0_29 = arith.constant 0 : index
      %c0_30 = arith.constant 0 : index
      %49 = vector.load %arg6[%c0_29, %c0_30] : memref<8x128xf32, #tpu.memory_space<vmem>>, vector<8x128xf32>
      %50 = math.tanh %49 : vector<8x128xf32>
      %c0_31 = arith.constant 0 : index
      %c0_32 = arith.constant 0 : index
      %51 = vector.load %arg7[%c0_31, %c0_32] : memref<8x128xf32, #tpu.memory_space<vmem>>, vector<8x128xf32>
      tpu.vector_store %arg7[%c0_31, %c0_32], %50 {strides = array<i32>} : memref<8x128xf32, #tpu.memory_space<vmem>>, vector<8x128xf32>,
      %52 = arith.index_cast %c2_i32 : i32 to index
      %c0_33 = arith.constant 0 : index
      %c0_34 = arith.constant 0 : index
      %53 = vector.load %arg4[%52, %c0_33, %c0_34] : memref<8x8x128xf32, #tpu.memory_space<vmem>>, vector<1x8x128xf32>
      %54 = vector.shape_cast %53 : vector<1x8x128xf32> to vector<8x128xf32>
      %55 = vector.shape_cast %50 : vector<8x128xf32> to vector<1x8x128xf32>
      tpu.vector_store %arg4[%52, %c0_33, %c0_34], %55 {strides = array<i32>} : memref<8x8x128xf32, #tpu.memory_space<vmem>>, vector<1x8x128xf32>,
      %c7_i32_35 = arith.constant 7 : i32
      %56 = arith.cmpi eq, %11, %c7_i32_35 : i32
      %57 = arith.extui %56 : i1 to i32
      %c0_i32_36 = arith.constant 0 : i32
      %58 = arith.cmpi ne, %57, %c0_i32_36 : i32
      scf.if %58 {
        %c0_37 = arith.constant 0 : index
        %c0_38 = arith.constant 0 : index
        %59 = vector.load %arg6[%c0_37, %c0_38] : memref<8x128xf32, #tpu.memory_space<vmem>>, vector<8x128xf32>
        %c0_39 = arith.constant 0 : index
        %c0_40 = arith.constant 0 : index
        %60 = vector.load %arg5[%c0_39, %c0_40] : memref<8x128xf32, #tpu.memory_space<vmem>>, vector<8x128xf32>
        tpu.vector_store %arg5[%c0_39, %c0_40], %59 {strides = array<i32>} : memref<8x128xf32, #tpu.memory_space<vmem>>, vector<8x128xf32>,
      } else {
      }
    } else {
    }
    %c3_i32 = arith.constant 3 : i32
    %c8_i32_8 = arith.constant 8 : i32
    %15 = arith.muli %arg0, %c8_i32_8 : i32
    %16 = arith.addi %15, %c3_i32 : i32
    %c8_i32_9 = arith.constant 8 : i32
    %17 = arith.cmpi slt, %16, %c8_i32_9 : i32
    %18 = arith.extui %17 : i1 to i32
    %c0_i32_10 = arith.constant 0 : i32
    %19 = arith.cmpi ne, %18, %c0_i32_10 : i32
    scf.if %19 {
      %40 = arith.index_cast %c3_i32 : i32 to index
      %c0 = arith.constant 0 : index
      %c0_24 = arith.constant 0 : index
      %41 = vector.load %arg1[%40, %c0, %c0_24] : memref<8x8x128xf32, #tpu.memory_space<vmem>>, vector<1x8x128xf32>
      %42 = vector.shape_cast %41 : vector<1x8x128xf32> to vector<8x128xf32>
      %c0_i32_25 = arith.constant 0 : i32
      %43 = arith.cmpi eq, %16, %c0_i32_25 : i32
      %44 = arith.extui %43 : i1 to i32
      %c0_i32_26 = arith.constant 0 : i32
      %45 = arith.cmpi ne, %44, %c0_i32_26 : i32
      scf.if %45 {
        %c0_37 = arith.constant 0 : index
        %c0_38 = arith.constant 0 : index
        %59 = vector.load %arg6[%c0_37, %c0_38] : memref<8x128xf32, #tpu.memory_space<vmem>>, vector<8x128xf32>
        tpu.vector_store %arg6[%c0_37, %c0_38], %42 {strides = array<i32>} : memref<8x128xf32, #tpu.memory_space<vmem>>, vector<8x128xf32>,
      } else {
      }
      %c0_i32_27 = arith.constant 0 : i32
      %46 = arith.cmpi sgt, %16, %c0_i32_27 : i32
      %47 = arith.extui %46 : i1 to i32
      %c0_i32_28 = arith.constant 0 : i32
      %48 = arith.cmpi ne, %47, %c0_i32_28 : i32
      scf.if %48 {
        %c0_37 = arith.constant 0 : index
        %c0_38 = arith.constant 0 : index
        %59 = vector.load %arg7[%c0_37, %c0_38] : memref<8x128xf32, #tpu.memory_space<vmem>>, vector<8x128xf32>
        %c0_39 = arith.constant 0 : index
        %c0_40 = arith.constant 0 : index
        %60 = vector.load %arg2[%c0_39, %c0_40] : memref<128x128xf32, #tpu.memory_space<vmem>>, vector<128x128xf32>
        %cst_41 = arith.constant dense<0.000000e+00> : vector<8x128xf32>
        %61 = tpu.matmul %59, %60, %cst_41 {dimension_numbers = #tpu.dot_dimension_numbers<[1], [0], [0], [1], [0, 0, 1, 1], [], []>} : vector<8x128xf32>, vector<128x128xf32>, vector<8x128xf32> -> vector<8x128xf32>
        %c0_42 = arith.constant 0 : index
        %c0_43 = arith.constant 0 : index
        %62 = vector.load %arg3[%c0_42, %c0_43] : memref<1x128xf32, #tpu.memory_space<vmem>>, vector<1x128xf32>
        %63 = vector.broadcast %62 : vector<1x128xf32> to vector<8x128xf32>
        %64 = arith.addf %61, %63 : vector<8x128xf32>
        %c0_44 = arith.constant 0 : index
        %c0_45 = arith.constant 0 : index
        %65 = vector.load %arg6[%c0_44, %c0_45] : memref<8x128xf32, #tpu.memory_space<vmem>>, vector<8x128xf32>
        %66 = arith.addf %42, %64 : vector<8x128xf32>
        %c0_46 = arith.constant 0 : index
        %c0_47 = arith.constant 0 : index
        %67 = vector.load %arg6[%c0_46, %c0_47] : memref<8x128xf32, #tpu.memory_space<vmem>>, vector<8x128xf32>
        %68 = arith.subf %66, %67 : vector<8x128xf32>
        %69 = vector.broadcast %cst : f32 to vector<8x128xf32>
        %70 = arith.mulf %69, %68 : vector<8x128xf32>
        %71 = arith.addf %65, %70 : vector<8x128xf32>
        %c0_48 = arith.constant 0 : index
        %c0_49 = arith.constant 0 : index
        %72 = vector.load %arg6[%c0_48, %c0_49] : memref<8x128xf32, #tpu.memory_space<vmem>>, vector<8x128xf32>
        tpu.vector_store %arg6[%c0_48, %c0_49], %71 {strides = array<i32>} : memref<8x128xf32, #tpu.memory_space<vmem>>, vector<8x128xf32>,
      } else {
      }
      %c0_29 = arith.constant 0 : index
      %c0_30 = arith.constant 0 : index
      %49 = vector.load %arg6[%c0_29, %c0_30] : memref<8x128xf32, #tpu.memory_space<vmem>>, vector<8x128xf32>
      %50 = math.tanh %49 : vector<8x128xf32>
      %c0_31 = arith.constant 0 : index
      %c0_32 = arith.constant 0 : index
      %51 = vector.load %arg7[%c0_31, %c0_32] : memref<8x128xf32, #tpu.memory_space<vmem>>, vector<8x128xf32>
      tpu.vector_store %arg7[%c0_31, %c0_32], %50 {strides = array<i32>} : memref<8x128xf32, #tpu.memory_space<vmem>>, vector<8x128xf32>,
      %52 = arith.index_cast %c3_i32 : i32 to index
      %c0_33 = arith.constant 0 : index
      %c0_34 = arith.constant 0 : index
      %53 = vector.load %arg4[%52, %c0_33, %c0_34] : memref<8x8x128xf32, #tpu.memory_space<vmem>>, vector<1x8x128xf32>
      %54 = vector.shape_cast %53 : vector<1x8x128xf32> to vector<8x128xf32>
      %55 = vector.shape_cast %50 : vector<8x128xf32> to vector<1x8x128xf32>
      tpu.vector_store %arg4[%52, %c0_33, %c0_34], %55 {strides = array<i32>} : memref<8x8x128xf32, #tpu.memory_space<vmem>>, vector<1x8x128xf32>,
      %c7_i32_35 = arith.constant 7 : i32
      %56 = arith.cmpi eq, %16, %c7_i32_35 : i32
      %57 = arith.extui %56 : i1 to i32
      %c0_i32_36 = arith.constant 0 : i32
      %58 = arith.cmpi ne, %57, %c0_i32_36 : i32
      scf.if %58 {
        %c0_37 = arith.constant 0 : index
        %c0_38 = arith.constant 0 : index
        %59 = vector.load %arg6[%c0_37, %c0_38] : memref<8x128xf32, #tpu.memory_space<vmem>>, vector<8x128xf32>
        %c0_39 = arith.constant 0 : index
        %c0_40 = arith.constant 0 : index
        %60 = vector.load %arg5[%c0_39, %c0_40] : memref<8x128xf32, #tpu.memory_space<vmem>>, vector<8x128xf32>
        tpu.vector_store %arg5[%c0_39, %c0_40], %59 {strides = array<i32>} : memref<8x128xf32, #tpu.memory_space<vmem>>, vector<8x128xf32>,
      } else {
      }
    } else {
    }
    %c4_i32 = arith.constant 4 : i32
    %c8_i32_11 = arith.constant 8 : i32
    %20 = arith.muli %arg0, %c8_i32_11 : i32
    %21 = arith.addi %20, %c4_i32 : i32
    %c8_i32_12 = arith.constant 8 : i32
    %22 = arith.cmpi slt, %21, %c8_i32_12 : i32
    %23 = arith.extui %22 : i1 to i32
    %c0_i32_13 = arith.constant 0 : i32
    %24 = arith.cmpi ne, %23, %c0_i32_13 : i32
    scf.if %24 {
      %40 = arith.index_cast %c4_i32 : i32 to index
      %c0 = arith.constant 0 : index
      %c0_24 = arith.constant 0 : index
      %41 = vector.load %arg1[%40, %c0, %c0_24] : memref<8x8x128xf32, #tpu.memory_space<vmem>>, vector<1x8x128xf32>
      %42 = vector.shape_cast %41 : vector<1x8x128xf32> to vector<8x128xf32>
      %c0_i32_25 = arith.constant 0 : i32
      %43 = arith.cmpi eq, %21, %c0_i32_25 : i32
      %44 = arith.extui %43 : i1 to i32
      %c0_i32_26 = arith.constant 0 : i32
      %45 = arith.cmpi ne, %44, %c0_i32_26 : i32
      scf.if %45 {
        %c0_37 = arith.constant 0 : index
        %c0_38 = arith.constant 0 : index
        %59 = vector.load %arg6[%c0_37, %c0_38] : memref<8x128xf32, #tpu.memory_space<vmem>>, vector<8x128xf32>
        tpu.vector_store %arg6[%c0_37, %c0_38], %42 {strides = array<i32>} : memref<8x128xf32, #tpu.memory_space<vmem>>, vector<8x128xf32>,
      } else {
      }
      %c0_i32_27 = arith.constant 0 : i32
      %46 = arith.cmpi sgt, %21, %c0_i32_27 : i32
      %47 = arith.extui %46 : i1 to i32
      %c0_i32_28 = arith.constant 0 : i32
      %48 = arith.cmpi ne, %47, %c0_i32_28 : i32
      scf.if %48 {
        %c0_37 = arith.constant 0 : index
        %c0_38 = arith.constant 0 : index
        %59 = vector.load %arg7[%c0_37, %c0_38] : memref<8x128xf32, #tpu.memory_space<vmem>>, vector<8x128xf32>
        %c0_39 = arith.constant 0 : index
        %c0_40 = arith.constant 0 : index
        %60 = vector.load %arg2[%c0_39, %c0_40] : memref<128x128xf32, #tpu.memory_space<vmem>>, vector<128x128xf32>
        %cst_41 = arith.constant dense<0.000000e+00> : vector<8x128xf32>
        %61 = tpu.matmul %59, %60, %cst_41 {dimension_numbers = #tpu.dot_dimension_numbers<[1], [0], [0], [1], [0, 0, 1, 1], [], []>} : vector<8x128xf32>, vector<128x128xf32>, vector<8x128xf32> -> vector<8x128xf32>
        %c0_42 = arith.constant 0 : index
        %c0_43 = arith.constant 0 : index
        %62 = vector.load %arg3[%c0_42, %c0_43] : memref<1x128xf32, #tpu.memory_space<vmem>>, vector<1x128xf32>
        %63 = vector.broadcast %62 : vector<1x128xf32> to vector<8x128xf32>
        %64 = arith.addf %61, %63 : vector<8x128xf32>
        %c0_44 = arith.constant 0 : index
        %c0_45 = arith.constant 0 : index
        %65 = vector.load %arg6[%c0_44, %c0_45] : memref<8x128xf32, #tpu.memory_space<vmem>>, vector<8x128xf32>
        %66 = arith.addf %42, %64 : vector<8x128xf32>
        %c0_46 = arith.constant 0 : index
        %c0_47 = arith.constant 0 : index
        %67 = vector.load %arg6[%c0_46, %c0_47] : memref<8x128xf32, #tpu.memory_space<vmem>>, vector<8x128xf32>
        %68 = arith.subf %66, %67 : vector<8x128xf32>
        %69 = vector.broadcast %cst : f32 to vector<8x128xf32>
        %70 = arith.mulf %69, %68 : vector<8x128xf32>
        %71 = arith.addf %65, %70 : vector<8x128xf32>
        %c0_48 = arith.constant 0 : index
        %c0_49 = arith.constant 0 : index
        %72 = vector.load %arg6[%c0_48, %c0_49] : memref<8x128xf32, #tpu.memory_space<vmem>>, vector<8x128xf32>
        tpu.vector_store %arg6[%c0_48, %c0_49], %71 {strides = array<i32>} : memref<8x128xf32, #tpu.memory_space<vmem>>, vector<8x128xf32>,
      } else {
      }
      %c0_29 = arith.constant 0 : index
      %c0_30 = arith.constant 0 : index
      %49 = vector.load %arg6[%c0_29, %c0_30] : memref<8x128xf32, #tpu.memory_space<vmem>>, vector<8x128xf32>
      %50 = math.tanh %49 : vector<8x128xf32>
      %c0_31 = arith.constant 0 : index
      %c0_32 = arith.constant 0 : index
      %51 = vector.load %arg7[%c0_31, %c0_32] : memref<8x128xf32, #tpu.memory_space<vmem>>, vector<8x128xf32>
      tpu.vector_store %arg7[%c0_31, %c0_32], %50 {strides = array<i32>} : memref<8x128xf32, #tpu.memory_space<vmem>>, vector<8x128xf32>,
      %52 = arith.index_cast %c4_i32 : i32 to index
      %c0_33 = arith.constant 0 : index
      %c0_34 = arith.constant 0 : index
      %53 = vector.load %arg4[%52, %c0_33, %c0_34] : memref<8x8x128xf32, #tpu.memory_space<vmem>>, vector<1x8x128xf32>
      %54 = vector.shape_cast %53 : vector<1x8x128xf32> to vector<8x128xf32>
      %55 = vector.shape_cast %50 : vector<8x128xf32> to vector<1x8x128xf32>
      tpu.vector_store %arg4[%52, %c0_33, %c0_34], %55 {strides = array<i32>} : memref<8x8x128xf32, #tpu.memory_space<vmem>>, vector<1x8x128xf32>,
      %c7_i32_35 = arith.constant 7 : i32
      %56 = arith.cmpi eq, %21, %c7_i32_35 : i32
      %57 = arith.extui %56 : i1 to i32
      %c0_i32_36 = arith.constant 0 : i32
      %58 = arith.cmpi ne, %57, %c0_i32_36 : i32
      scf.if %58 {
        %c0_37 = arith.constant 0 : index
        %c0_38 = arith.constant 0 : index
        %59 = vector.load %arg6[%c0_37, %c0_38] : memref<8x128xf32, #tpu.memory_space<vmem>>, vector<8x128xf32>
        %c0_39 = arith.constant 0 : index
        %c0_40 = arith.constant 0 : index
        %60 = vector.load %arg5[%c0_39, %c0_40] : memref<8x128xf32, #tpu.memory_space<vmem>>, vector<8x128xf32>
        tpu.vector_store %arg5[%c0_39, %c0_40], %59 {strides = array<i32>} : memref<8x128xf32, #tpu.memory_space<vmem>>, vector<8x128xf32>,
      } else {
      }
    } else {
    }
    %c5_i32 = arith.constant 5 : i32
    %c8_i32_14 = arith.constant 8 : i32
    %25 = arith.muli %arg0, %c8_i32_14 : i32
    %26 = arith.addi %25, %c5_i32 : i32
    %c8_i32_15 = arith.constant 8 : i32
    %27 = arith.cmpi slt, %26, %c8_i32_15 : i32
    %28 = arith.extui %27 : i1 to i32
    %c0_i32_16 = arith.constant 0 : i32
    %29 = arith.cmpi ne, %28, %c0_i32_16 : i32
    scf.if %29 {
      %40 = arith.index_cast %c5_i32 : i32 to index
      %c0 = arith.constant 0 : index
      %c0_24 = arith.constant 0 : index
      %41 = vector.load %arg1[%40, %c0, %c0_24] : memref<8x8x128xf32, #tpu.memory_space<vmem>>, vector<1x8x128xf32>
      %42 = vector.shape_cast %41 : vector<1x8x128xf32> to vector<8x128xf32>
      %c0_i32_25 = arith.constant 0 : i32
      %43 = arith.cmpi eq, %26, %c0_i32_25 : i32
      %44 = arith.extui %43 : i1 to i32
      %c0_i32_26 = arith.constant 0 : i32
      %45 = arith.cmpi ne, %44, %c0_i32_26 : i32
      scf.if %45 {
        %c0_37 = arith.constant 0 : index
        %c0_38 = arith.constant 0 : index
        %59 = vector.load %arg6[%c0_37, %c0_38] : memref<8x128xf32, #tpu.memory_space<vmem>>, vector<8x128xf32>
        tpu.vector_store %arg6[%c0_37, %c0_38], %42 {strides = array<i32>} : memref<8x128xf32, #tpu.memory_space<vmem>>, vector<8x128xf32>,
      } else {
      }
      %c0_i32_27 = arith.constant 0 : i32
      %46 = arith.cmpi sgt, %26, %c0_i32_27 : i32
      %47 = arith.extui %46 : i1 to i32
      %c0_i32_28 = arith.constant 0 : i32
      %48 = arith.cmpi ne, %47, %c0_i32_28 : i32
      scf.if %48 {
        %c0_37 = arith.constant 0 : index
        %c0_38 = arith.constant 0 : index
        %59 = vector.load %arg7[%c0_37, %c0_38] : memref<8x128xf32, #tpu.memory_space<vmem>>, vector<8x128xf32>
        %c0_39 = arith.constant 0 : index
        %c0_40 = arith.constant 0 : index
        %60 = vector.load %arg2[%c0_39, %c0_40] : memref<128x128xf32, #tpu.memory_space<vmem>>, vector<128x128xf32>
        %cst_41 = arith.constant dense<0.000000e+00> : vector<8x128xf32>
        %61 = tpu.matmul %59, %60, %cst_41 {dimension_numbers = #tpu.dot_dimension_numbers<[1], [0], [0], [1], [0, 0, 1, 1], [], []>} : vector<8x128xf32>, vector<128x128xf32>, vector<8x128xf32> -> vector<8x128xf32>
        %c0_42 = arith.constant 0 : index
        %c0_43 = arith.constant 0 : index
        %62 = vector.load %arg3[%c0_42, %c0_43] : memref<1x128xf32, #tpu.memory_space<vmem>>, vector<1x128xf32>
        %63 = vector.broadcast %62 : vector<1x128xf32> to vector<8x128xf32>
        %64 = arith.addf %61, %63 : vector<8x128xf32>
        %c0_44 = arith.constant 0 : index
        %c0_45 = arith.constant 0 : index
        %65 = vector.load %arg6[%c0_44, %c0_45] : memref<8x128xf32, #tpu.memory_space<vmem>>, vector<8x128xf32>
        %66 = arith.addf %42, %64 : vector<8x128xf32>
        %c0_46 = arith.constant 0 : index
        %c0_47 = arith.constant 0 : index
        %67 = vector.load %arg6[%c0_46, %c0_47] : memref<8x128xf32, #tpu.memory_space<vmem>>, vector<8x128xf32>
        %68 = arith.subf %66, %67 : vector<8x128xf32>
        %69 = vector.broadcast %cst : f32 to vector<8x128xf32>
        %70 = arith.mulf %69, %68 : vector<8x128xf32>
        %71 = arith.addf %65, %70 : vector<8x128xf32>
        %c0_48 = arith.constant 0 : index
        %c0_49 = arith.constant 0 : index
        %72 = vector.load %arg6[%c0_48, %c0_49] : memref<8x128xf32, #tpu.memory_space<vmem>>, vector<8x128xf32>
        tpu.vector_store %arg6[%c0_48, %c0_49], %71 {strides = array<i32>} : memref<8x128xf32, #tpu.memory_space<vmem>>, vector<8x128xf32>,
      } else {
      }
      %c0_29 = arith.constant 0 : index
      %c0_30 = arith.constant 0 : index
      %49 = vector.load %arg6[%c0_29, %c0_30] : memref<8x128xf32, #tpu.memory_space<vmem>>, vector<8x128xf32>
      %50 = math.tanh %49 : vector<8x128xf32>
      %c0_31 = arith.constant 0 : index
      %c0_32 = arith.constant 0 : index
      %51 = vector.load %arg7[%c0_31, %c0_32] : memref<8x128xf32, #tpu.memory_space<vmem>>, vector<8x128xf32>
      tpu.vector_store %arg7[%c0_31, %c0_32], %50 {strides = array<i32>} : memref<8x128xf32, #tpu.memory_space<vmem>>, vector<8x128xf32>,
      %52 = arith.index_cast %c5_i32 : i32 to index
      %c0_33 = arith.constant 0 : index
      %c0_34 = arith.constant 0 : index
      %53 = vector.load %arg4[%52, %c0_33, %c0_34] : memref<8x8x128xf32, #tpu.memory_space<vmem>>, vector<1x8x128xf32>
      %54 = vector.shape_cast %53 : vector<1x8x128xf32> to vector<8x128xf32>
      %55 = vector.shape_cast %50 : vector<8x128xf32> to vector<1x8x128xf32>
      tpu.vector_store %arg4[%52, %c0_33, %c0_34], %55 {strides = array<i32>} : memref<8x8x128xf32, #tpu.memory_space<vmem>>, vector<1x8x128xf32>,
      %c7_i32_35 = arith.constant 7 : i32
      %56 = arith.cmpi eq, %26, %c7_i32_35 : i32
      %57 = arith.extui %56 : i1 to i32
      %c0_i32_36 = arith.constant 0 : i32
      %58 = arith.cmpi ne, %57, %c0_i32_36 : i32
      scf.if %58 {
        %c0_37 = arith.constant 0 : index
        %c0_38 = arith.constant 0 : index
        %59 = vector.load %arg6[%c0_37, %c0_38] : memref<8x128xf32, #tpu.memory_space<vmem>>, vector<8x128xf32>
        %c0_39 = arith.constant 0 : index
        %c0_40 = arith.constant 0 : index
        %60 = vector.load %arg5[%c0_39, %c0_40] : memref<8x128xf32, #tpu.memory_space<vmem>>, vector<8x128xf32>
        tpu.vector_store %arg5[%c0_39, %c0_40], %59 {strides = array<i32>} : memref<8x128xf32, #tpu.memory_space<vmem>>, vector<8x128xf32>,
      } else {
      }
    } else {
    }
    %c6_i32 = arith.constant 6 : i32
    %c8_i32_17 = arith.constant 8 : i32
    %30 = arith.muli %arg0, %c8_i32_17 : i32
    %31 = arith.addi %30, %c6_i32 : i32
    %c8_i32_18 = arith.constant 8 : i32
    %32 = arith.cmpi slt, %31, %c8_i32_18 : i32
    %33 = arith.extui %32 : i1 to i32
    %c0_i32_19 = arith.constant 0 : i32
    %34 = arith.cmpi ne, %33, %c0_i32_19 : i32
    scf.if %34 {
      %40 = arith.index_cast %c6_i32 : i32 to index
      %c0 = arith.constant 0 : index
      %c0_24 = arith.constant 0 : index
      %41 = vector.load %arg1[%40, %c0, %c0_24] : memref<8x8x128xf32, #tpu.memory_space<vmem>>, vector<1x8x128xf32>
      %42 = vector.shape_cast %41 : vector<1x8x128xf32> to vector<8x128xf32>
      %c0_i32_25 = arith.constant 0 : i32
      %43 = arith.cmpi eq, %31, %c0_i32_25 : i32
      %44 = arith.extui %43 : i1 to i32
      %c0_i32_26 = arith.constant 0 : i32
      %45 = arith.cmpi ne, %44, %c0_i32_26 : i32
      scf.if %45 {
        %c0_37 = arith.constant 0 : index
        %c0_38 = arith.constant 0 : index
        %59 = vector.load %arg6[%c0_37, %c0_38] : memref<8x128xf32, #tpu.memory_space<vmem>>, vector<8x128xf32>
        tpu.vector_store %arg6[%c0_37, %c0_38], %42 {strides = array<i32>} : memref<8x128xf32, #tpu.memory_space<vmem>>, vector<8x128xf32>,
      } else {
      }
      %c0_i32_27 = arith.constant 0 : i32
      %46 = arith.cmpi sgt, %31, %c0_i32_27 : i32
      %47 = arith.extui %46 : i1 to i32
      %c0_i32_28 = arith.constant 0 : i32
      %48 = arith.cmpi ne, %47, %c0_i32_28 : i32
      scf.if %48 {
        %c0_37 = arith.constant 0 : index
        %c0_38 = arith.constant 0 : index
        %59 = vector.load %arg7[%c0_37, %c0_38] : memref<8x128xf32, #tpu.memory_space<vmem>>, vector<8x128xf32>
        %c0_39 = arith.constant 0 : index
        %c0_40 = arith.constant 0 : index
        %60 = vector.load %arg2[%c0_39, %c0_40] : memref<128x128xf32, #tpu.memory_space<vmem>>, vector<128x128xf32>
        %cst_41 = arith.constant dense<0.000000e+00> : vector<8x128xf32>
        %61 = tpu.matmul %59, %60, %cst_41 {dimension_numbers = #tpu.dot_dimension_numbers<[1], [0], [0], [1], [0, 0, 1, 1], [], []>} : vector<8x128xf32>, vector<128x128xf32>, vector<8x128xf32> -> vector<8x128xf32>
        %c0_42 = arith.constant 0 : index
        %c0_43 = arith.constant 0 : index
        %62 = vector.load %arg3[%c0_42, %c0_43] : memref<1x128xf32, #tpu.memory_space<vmem>>, vector<1x128xf32>
        %63 = vector.broadcast %62 : vector<1x128xf32> to vector<8x128xf32>
        %64 = arith.addf %61, %63 : vector<8x128xf32>
        %c0_44 = arith.constant 0 : index
        %c0_45 = arith.constant 0 : index
        %65 = vector.load %arg6[%c0_44, %c0_45] : memref<8x128xf32, #tpu.memory_space<vmem>>, vector<8x128xf32>
        %66 = arith.addf %42, %64 : vector<8x128xf32>
        %c0_46 = arith.constant 0 : index
        %c0_47 = arith.constant 0 : index
        %67 = vector.load %arg6[%c0_46, %c0_47] : memref<8x128xf32, #tpu.memory_space<vmem>>, vector<8x128xf32>
        %68 = arith.subf %66, %67 : vector<8x128xf32>
        %69 = vector.broadcast %cst : f32 to vector<8x128xf32>
        %70 = arith.mulf %69, %68 : vector<8x128xf32>
        %71 = arith.addf %65, %70 : vector<8x128xf32>
        %c0_48 = arith.constant 0 : index
        %c0_49 = arith.constant 0 : index
        %72 = vector.load %arg6[%c0_48, %c0_49] : memref<8x128xf32, #tpu.memory_space<vmem>>, vector<8x128xf32>
        tpu.vector_store %arg6[%c0_48, %c0_49], %71 {strides = array<i32>} : memref<8x128xf32, #tpu.memory_space<vmem>>, vector<8x128xf32>,
      } else {
      }
      %c0_29 = arith.constant 0 : index
      %c0_30 = arith.constant 0 : index
      %49 = vector.load %arg6[%c0_29, %c0_30] : memref<8x128xf32, #tpu.memory_space<vmem>>, vector<8x128xf32>
      %50 = math.tanh %49 : vector<8x128xf32>
      %c0_31 = arith.constant 0 : index
      %c0_32 = arith.constant 0 : index
      %51 = vector.load %arg7[%c0_31, %c0_32] : memref<8x128xf32, #tpu.memory_space<vmem>>, vector<8x128xf32>
      tpu.vector_store %arg7[%c0_31, %c0_32], %50 {strides = array<i32>} : memref<8x128xf32, #tpu.memory_space<vmem>>, vector<8x128xf32>,
      %52 = arith.index_cast %c6_i32 : i32 to index
      %c0_33 = arith.constant 0 : index
      %c0_34 = arith.constant 0 : index
      %53 = vector.load %arg4[%52, %c0_33, %c0_34] : memref<8x8x128xf32, #tpu.memory_space<vmem>>, vector<1x8x128xf32>
      %54 = vector.shape_cast %53 : vector<1x8x128xf32> to vector<8x128xf32>
      %55 = vector.shape_cast %50 : vector<8x128xf32> to vector<1x8x128xf32>
      tpu.vector_store %arg4[%52, %c0_33, %c0_34], %55 {strides = array<i32>} : memref<8x8x128xf32, #tpu.memory_space<vmem>>, vector<1x8x128xf32>,
      %c7_i32_35 = arith.constant 7 : i32
      %56 = arith.cmpi eq, %31, %c7_i32_35 : i32
      %57 = arith.extui %56 : i1 to i32
      %c0_i32_36 = arith.constant 0 : i32
      %58 = arith.cmpi ne, %57, %c0_i32_36 : i32
      scf.if %58 {
        %c0_37 = arith.constant 0 : index
        %c0_38 = arith.constant 0 : index
        %59 = vector.load %arg6[%c0_37, %c0_38] : memref<8x128xf32, #tpu.memory_space<vmem>>, vector<8x128xf32>
        %c0_39 = arith.constant 0 : index
        %c0_40 = arith.constant 0 : index
        %60 = vector.load %arg5[%c0_39, %c0_40] : memref<8x128xf32, #tpu.memory_space<vmem>>, vector<8x128xf32>
        tpu.vector_store %arg5[%c0_39, %c0_40], %59 {strides = array<i32>} : memref<8x128xf32, #tpu.memory_space<vmem>>, vector<8x128xf32>,
      } else {
      }
    } else {
    }
    %c7_i32 = arith.constant 7 : i32
    %c8_i32_20 = arith.constant 8 : i32
    %35 = arith.muli %arg0, %c8_i32_20 : i32
    %36 = arith.addi %35, %c7_i32 : i32
    %c8_i32_21 = arith.constant 8 : i32
    %37 = arith.cmpi slt, %36, %c8_i32_21 : i32
    %38 = arith.extui %37 : i1 to i32
    %c0_i32_22 = arith.constant 0 : i32
    %39 = arith.cmpi ne, %38, %c0_i32_22 : i32
    scf.if %39 {
      %40 = arith.index_cast %c7_i32 : i32 to index
      %c0 = arith.constant 0 : index
      %c0_24 = arith.constant 0 : index
      %41 = vector.load %arg1[%40, %c0, %c0_24] : memref<8x8x128xf32, #tpu.memory_space<vmem>>, vector<1x8x128xf32>
      %42 = vector.shape_cast %41 : vector<1x8x128xf32> to vector<8x128xf32>
      %c0_i32_25 = arith.constant 0 : i32
      %43 = arith.cmpi eq, %36, %c0_i32_25 : i32
      %44 = arith.extui %43 : i1 to i32
      %c0_i32_26 = arith.constant 0 : i32
      %45 = arith.cmpi ne, %44, %c0_i32_26 : i32
      scf.if %45 {
        %c0_37 = arith.constant 0 : index
        %c0_38 = arith.constant 0 : index
        %59 = vector.load %arg6[%c0_37, %c0_38] : memref<8x128xf32, #tpu.memory_space<vmem>>, vector<8x128xf32>
        tpu.vector_store %arg6[%c0_37, %c0_38], %42 {strides = array<i32>} : memref<8x128xf32, #tpu.memory_space<vmem>>, vector<8x128xf32>,
      } else {
      }
      %c0_i32_27 = arith.constant 0 : i32
      %46 = arith.cmpi sgt, %36, %c0_i32_27 : i32
      %47 = arith.extui %46 : i1 to i32
      %c0_i32_28 = arith.constant 0 : i32
      %48 = arith.cmpi ne, %47, %c0_i32_28 : i32
      scf.if %48 {
        %c0_37 = arith.constant 0 : index
        %c0_38 = arith.constant 0 : index
        %59 = vector.load %arg7[%c0_37, %c0_38] : memref<8x128xf32, #tpu.memory_space<vmem>>, vector<8x128xf32>
        %c0_39 = arith.constant 0 : index
        %c0_40 = arith.constant 0 : index
        %60 = vector.load %arg2[%c0_39, %c0_40] : memref<128x128xf32, #tpu.memory_space<vmem>>, vector<128x128xf32>
        %cst_41 = arith.constant dense<0.000000e+00> : vector<8x128xf32>
        %61 = tpu.matmul %59, %60, %cst_41 {dimension_numbers = #tpu.dot_dimension_numbers<[1], [0], [0], [1], [0, 0, 1, 1], [], []>} : vector<8x128xf32>, vector<128x128xf32>, vector<8x128xf32> -> vector<8x128xf32>
        %c0_42 = arith.constant 0 : index
        %c0_43 = arith.constant 0 : index
        %62 = vector.load %arg3[%c0_42, %c0_43] : memref<1x128xf32, #tpu.memory_space<vmem>>, vector<1x128xf32>
        %63 = vector.broadcast %62 : vector<1x128xf32> to vector<8x128xf32>
        %64 = arith.addf %61, %63 : vector<8x128xf32>
        %c0_44 = arith.constant 0 : index
        %c0_45 = arith.constant 0 : index
        %65 = vector.load %arg6[%c0_44, %c0_45] : memref<8x128xf32, #tpu.memory_space<vmem>>, vector<8x128xf32>
        %66 = arith.addf %42, %64 : vector<8x128xf32>
        %c0_46 = arith.constant 0 : index
        %c0_47 = arith.constant 0 : index
        %67 = vector.load %arg6[%c0_46, %c0_47] : memref<8x128xf32, #tpu.memory_space<vmem>>, vector<8x128xf32>
        %68 = arith.subf %66, %67 : vector<8x128xf32>
        %69 = vector.broadcast %cst : f32 to vector<8x128xf32>
        %70 = arith.mulf %69, %68 : vector<8x128xf32>
        %71 = arith.addf %65, %70 : vector<8x128xf32>
        %c0_48 = arith.constant 0 : index
        %c0_49 = arith.constant 0 : index
        %72 = vector.load %arg6[%c0_48, %c0_49] : memref<8x128xf32, #tpu.memory_space<vmem>>, vector<8x128xf32>
        tpu.vector_store %arg6[%c0_48, %c0_49], %71 {strides = array<i32>} : memref<8x128xf32, #tpu.memory_space<vmem>>, vector<8x128xf32>,
      } else {
      }
      %c0_29 = arith.constant 0 : index
      %c0_30 = arith.constant 0 : index
      %49 = vector.load %arg6[%c0_29, %c0_30] : memref<8x128xf32, #tpu.memory_space<vmem>>, vector<8x128xf32>
      %50 = math.tanh %49 : vector<8x128xf32>
      %c0_31 = arith.constant 0 : index
      %c0_32 = arith.constant 0 : index
      %51 = vector.load %arg7[%c0_31, %c0_32] : memref<8x128xf32, #tpu.memory_space<vmem>>, vector<8x128xf32>
      tpu.vector_store %arg7[%c0_31, %c0_32], %50 {strides = array<i32>} : memref<8x128xf32, #tpu.memory_space<vmem>>, vector<8x128xf32>,
      %52 = arith.index_cast %c7_i32 : i32 to index
      %c0_33 = arith.constant 0 : index
      %c0_34 = arith.constant 0 : index
      %53 = vector.load %arg4[%52, %c0_33, %c0_34] : memref<8x8x128xf32, #tpu.memory_space<vmem>>, vector<1x8x128xf32>
      %54 = vector.shape_cast %53 : vector<1x8x128xf32> to vector<8x128xf32>
      %55 = vector.shape_cast %50 : vector<8x128xf32> to vector<1x8x128xf32>
      tpu.vector_store %arg4[%52, %c0_33, %c0_34], %55 {strides = array<i32>} : memref<8x8x128xf32, #tpu.memory_space<vmem>>, vector<1x8x128xf32>,
      %c7_i32_35 = arith.constant 7 : i32
      %56 = arith.cmpi eq, %36, %c7_i32_35 : i32
      %57 = arith.extui %56 : i1 to i32
      %c0_i32_36 = arith.constant 0 : i32
      %58 = arith.cmpi ne, %57, %c0_i32_36 : i32
      scf.if %58 {
        %c0_37 = arith.constant 0 : index
        %c0_38 = arith.constant 0 : index
        %59 = vector.load %arg6[%c0_37, %c0_38] : memref<8x128xf32, #tpu.memory_space<vmem>>, vector<8x128xf32>
        %c0_39 = arith.constant 0 : index
        %c0_40 = arith.constant 0 : index
        %60 = vector.load %arg5[%c0_39, %c0_40] : memref<8x128xf32, #tpu.memory_space<vmem>>, vector<8x128xf32>
        tpu.vector_store %arg5[%c0_39, %c0_40], %59 {strides = array<i32>} : memref<8x128xf32, #tpu.memory_space<vmem>>, vector<8x128xf32>,
      } else {
      }
    } else {
    }
    %c8_i32_23 = arith.constant 8 : i32
    return
  }
  func.func @transform_0(%arg0: i32) -> (i32, i32, i32) {
    %c0_i32 = arith.constant 0 : i32
    %c0_i32_0 = arith.constant 0 : i32
    %c0_i32_1 = arith.constant 0 : i32
    return %arg0, %c0_i32, %c0_i32_0 : i32, i32, i32
  }
  func.func @transform_1(%arg0: i32) -> (i32, i32) {
    %c0_i32 = arith.constant 0 : i32
    %c0_i32_0 = arith.constant 0 : i32
    %c0_i32_1 = arith.constant 0 : i32
    return %c0_i32, %c0_i32_0 : i32, i32
  }
  func.func @transform_2(%arg0: i32) -> (i32, i32) {
    %c0_i32 = arith.constant 0 : i32
    %c0_i32_0 = arith.constant 0 : i32
    %c0_i32_1 = arith.constant 0 : i32
    return %c0_i32, %c0_i32_0 : i32, i32
  }
  func.func @transform_3(%arg0: i32) -> (i32, i32, i32) {
    %c0_i32 = arith.constant 0 : i32
    %c0_i32_0 = arith.constant 0 : i32
    %c0_i32_1 = arith.constant 0 : i32
    return %arg0, %c0_i32, %c0_i32_0 : i32, i32, i32
  }
  func.func @transform_4(%arg0: i32) -> (i32, i32) {
    %c0_i32 = arith.constant 0 : i32
    %c0_i32_0 = arith.constant 0 : i32
    %c0_i32_1 = arith.constant 0 : i32
    return %c0_i32, %c0_i32_0 : i32, i32
  }
}

</mosaic_0001>

<llo_original>
// kernel: tpu_custom_call.1
$region0: #{tpu_custom_call.1}
  #allocation0 [shape = 'u32[]', space=smem, size = 0x4, offset = 0x4, fixed_abs, tag = 'smem constant byte address 0x4 - core index']
  #allocation1 [shape = 'u32[144,128]{1,0:T(1,128)}', space=vmem, size = 0x12000, scoped, tag = 'internal scratch']
  #allocation2 [shape = 'f32[8,128]{1,0:T(8,128)}', space=vmem, size = 0x1000, scoped, tag = 'scratch operand']
  #allocation3 [shape = 'f32[8,128]{1,0:T(8,128)}', space=vmem, size = 0x1000, scoped, tag = 'scratch operand']
  %s0 = inlined_call_operand.hbm [shape: f32[8,8,128], index: 0, kind: input, shape index: {}]
  %s1 = inlined_call_operand.hbm [shape: f32[128,128], index: 1, kind: input, shape index: {}]
  %s2 = inlined_call_operand.vmem [shape: f32[1,128], index: 2, kind: input, shape index: {}]
  %s3 = inlined_call_operand.hbm [shape: f32[8,8,128], index: 3, kind: output, shape index: {0}]
  %s4 = inlined_call_operand.hbm [shape: f32[8,128], index: 4, kind: output, shape index: {1}]
  %5 = xla_tuple %s3, %s4
  %s6 = sld [smem:[#allocation0]]
  $region166: #{tpu_custom_call.1} parent=0
    _
  %s8 = ssub.s32 1, %s6
  %s9 = scalar_select 0, %s8, %s6
  $region1: #{tpu_custom_call.1} parent=0
    #allocation4 [shape = 'u8[32768]{0}', space=vmem, size = 0x8000, scoped, tag = 'input window, operand 0, single buffered']
    #allocation5 [shape = 's32[1]{0}', space=sflag, size = 0x4, scoped, tag = 'scoped memory for tpu_custom_call.1']
    #allocation6 [shape = 's32[1]{0}', space=sflag, size = 0x4, scoped, tag = 'scoped memory for tpu_custom_call.1']
    #allocation7 [shape = 'u8[65536]{0}', space=vmem, size = 0x10000, scoped, tag = 'input window, operand 1, single buffered']
    #allocation8 [shape = 's32[1]{0}', space=sflag, size = 0x4, scoped, tag = 'scoped memory for tpu_custom_call.1']
    #allocation9 [shape = 'u8[32768]{0}', space=vmem, size = 0x8000, scoped, tag = 'output window, operand 0, single buffered']
    #allocation10 [shape = 'u8[4096]{0}', space=vmem, size = 0x1000, scoped, tag = 'output window, operand 1, single buffered']
    #allocation11 [shape = 's32[1]{0}', space=sflag, size = 0x4, scoped, tag = 'scoped memory for tpu_custom_call.1']
    %10 = vsyncpa [#allocation5], 0
    %11 = vsyncpa [#allocation8], 0
    %12 = vsyncpa [#allocation6], 0
    %13 = vsyncpa [#allocation11], 0
    // Predicated region
    $region2: #{tpu_custom_call.1} parent=1 // pred_check
      _
    $region3: #{tpu_custom_call.1} parent=1 // pred_check_branch
      %15 = sbr.rel (0) target = $region5
    $region4: #{tpu_custom_call.1} parent=1 // pred_region
      %s17 = ssub.s32 1024, 1024
      %18 = vsyncadd [#allocation5], %s17
      %s19 = sshll.u32 [#allocation4], 4
      %s20 = int_to_ptr.vmem [resolvable:$true] %s19
      %25 = dma.hbm_to_vmem [thread:$0]  %s0, 1024, %s20, [#allocation5], 128, 128, 8
    $region5: #{tpu_custom_call.1} parent=1 // pred_fallthru
      _
    // Predicated region
    $region6: #{tpu_custom_call.1} parent=1 // pred_check
      _
    $region7: #{tpu_custom_call.1} parent=1 // pred_check_branch
      %27 = sbr.rel (0) target = $region9
    $region8: #{tpu_custom_call.1} parent=1 // pred_region
      %s29 = ssub.s32 2048, 2048
      %30 = vsyncadd [#allocation8], %s29
      %s31 = sshll.u32 [#allocation7], 4
      %s32 = int_to_ptr.vmem [resolvable:$true] %s31
      %37 = dma.hbm_to_vmem [thread:$0]  %s1, 2048, %s32, [#allocation8], 128, 128, 8
    $region9: #{tpu_custom_call.1} parent=1 // pred_fallthru
      _
    // Predicated region
    $region10: #{tpu_custom_call.1} parent=1 // pred_check
      _
    $region11: #{tpu_custom_call.1} parent=1 // pred_check_branch
      %39 = sbr.rel (0) target = $region13
    $region12: #{tpu_custom_call.1} parent=1 // pred_region
      _
    $region13: #{tpu_custom_call.1} parent=1 // pred_fallthru
      _
    // Predicated region
    $region14: #{tpu_custom_call.1} parent=1 // pred_check
      _
    $region15: #{tpu_custom_call.1} parent=1 // pred_check_branch
      %41 = sbr.rel (0) target = $region17
    $region16: #{tpu_custom_call.1} parent=1 // pred_region
      %42 = dma.done [#allocation5], 1024
    $region17: #{tpu_custom_call.1} parent=1 // pred_fallthru
      _
    // Predicated region
    $region18: #{tpu_custom_call.1} parent=1 // pred_check
      _
    $region19: #{tpu_custom_call.1} parent=1 // pred_check_branch
      %44 = sbr.rel (0) target = $region21
    $region20: #{tpu_custom_call.1} parent=1 // pred_region
      %45 = dma.done [#allocation8], 2048
    $region21: #{tpu_custom_call.1} parent=1 // pred_fallthru
      _
    %s46 = smul.u32 0, 8
    %p47 = scmp.lt.s32.totalorder %s46, 8
    // Predicated region
    $region22: #{tpu_custom_call.1} parent=1 // pred_check
      %p48 = pneg %p47
    $region23: #{tpu_custom_call.1} parent=1 // pred_check_branch
      %50 = sbr.rel (%p48) target = $region25
    $region24: #{tpu_custom_call.1} parent=1 // pred_region
      %v51 = vld [vmem:[#allocation4] sm:$0xff]
      %p52 = scmp.eq.s32.totalorder %s46, 0
      // Predicated region
      $region26: #{tpu_custom_call.1} parent=24 // pred_check
        %p53 = pneg %p52
      $region27: #{tpu_custom_call.1} parent=24 // pred_check_branch
        %55 = sbr.rel (%p53) target = $region29
      $region28: #{tpu_custom_call.1} parent=24 // pred_region
        %56 = vst [vmem:[#allocation2] sm:$0xff] %v51
      $region29: #{tpu_custom_call.1} parent=24 // pred_fallthru
        _
      %p57 = scmp.gt.s32.totalorder %s46, 0
      // Predicated region
      $region30: #{tpu_custom_call.1} parent=24 // pred_check
        %p58 = pneg %p57
      $region31: #{tpu_custom_call.1} parent=24 // pred_check_branch
        %60 = sbr.rel (%p58) target = $region33
      $region32: #{tpu_custom_call.1} parent=24 // pred_region
        %v61 = vld [vmem:[#allocation3] sm:$0xff]
        %v62 = vld [vmem:[#allocation7] sm:$0xff]
        %v63 = vld [vmem:[#allocation7 + $0x8] sm:$0xff]
        %v64 = vld [vmem:[#allocation7 + $0x10] sm:$0xff]
        %v65 = vld [vmem:[#allocation7 + $0x18] sm:$0xff]
        %v66 = vld [vmem:[#allocation7 + $0x20] sm:$0xff]
        %v67 = vld [vmem:[#allocation7 + $0x28] sm:$0xff]
        %v68 = vld [vmem:[#allocation7 + $0x30] sm:$0xff]
        %v69 = vld [vmem:[#allocation7 + $0x38] sm:$0xff]
        %v70 = vld [vmem:[#allocation7 + $0x40] sm:$0xff]
        %v71 = vld [vmem:[#allocation7 + $0x48] sm:$0xff]
        %v72 = vld [vmem:[#allocation7 + $0x50] sm:$0xff]
        %v73 = vld [vmem:[#allocation7 + $0x58] sm:$0xff]
        %v74 = vld [vmem:[#allocation7 + $0x60] sm:$0xff]
        %v75 = vld [vmem:[#allocation7 + $0x68] sm:$0xff]
        %v76 = vld [vmem:[#allocation7 + $0x70] sm:$0xff]
        %v77 = vld [vmem:[#allocation7 + $0x78] sm:$0xff]
        %v78 = vld [vmem:[%s2] sm:$0x1]
        %v80 = vlaneseq
        %v81 = vshrl.u32 %v80, 7
        %v82 = vsub.s32 0, %v81
        %v83 = vrot.slane %v78, %v82
        %85 = vmatprep.subr.mxu0 0.0
        %86 = vmatpush1.msra.mxu0 %v77
        %87 = vmatprep.subr.mxu0 0.0
        %88 = vmatpush1.msra.mxu0 %v76
        %89 = vmatprep.subr.mxu0 0.0
        %90 = vmatpush1.msra.mxu0 %v75
        %91 = vmatprep.subr.mxu0 0.0
        %92 = vmatpush1.msra.mxu0 %v74
        %93 = vmatprep.subr.mxu0 0.0
        %94 = vmatpush1.msra.mxu0 %v73
        %95 = vmatprep.subr.mxu0 0.0
        %96 = vmatpush1.msra.mxu0 %v72
        %97 = vmatprep.subr.mxu0 0.0
        %98 = vmatpush1.msra.mxu0 %v71
        %99 = vmatprep.subr.mxu0 0.0
        %100 = vmatpush1.msra.mxu0 %v70
        %101 = vmatprep.subr.mxu0 0.0
        %102 = vmatpush1.msra.mxu0 %v69
        %103 = vmatprep.subr.mxu0 0.0
        %104 = vmatpush1.msra.mxu0 %v68
        %105 = vmatprep.subr.mxu0 0.0
        %106 = vmatpush1.msra.mxu0 %v67
        %107 = vmatprep.subr.mxu0 0.0
        %108 = vmatpush1.msra.mxu0 %v66
        %109 = vmatprep.subr.mxu0 0.0
        %110 = vmatpush1.msra.mxu0 %v65
        %111 = vmatprep.subr.mxu0 0.0
        %112 = vmatpush1.msra.mxu0 %v64
        %113 = vmatprep.subr.mxu0 0.0
        %114 = vmatpush1.msra.mxu0 %v63
        %115 = vmatprep.subr.mxu0 0.0
        %116 = vmatpush1.msra.mxu0 %v62
        %117 = vmatprep.subr.mxu0 0.0
        %118 = vmatpush2.msra.mxu0 0.0
        %119 = vmatprep.subr.mxu0 0.0
        %120 = vmatpush2.msra.mxu0 0.0
        %121 = vmatprep.subr.mxu0 0.0
        %122 = vmatpush2.msra.mxu0 0.0
        %123 = vmatprep.subr.mxu0 0.0
        %124 = vmatpush2.msra.mxu0 0.0
        %125 = vmatprep.subr.mxu0 0.0
        %126 = vmatpush2.msra.mxu0 0.0
        %127 = vmatprep.subr.mxu0 0.0
        %128 = vmatpush2.msra.mxu0 0.0
        %129 = vmatprep.subr.mxu0 0.0
        %130 = vmatpush2.msra.mxu0 0.0
        %131 = vmatprep.subr.mxu0 0.0
        %132 = vmatpush2.msra.mxu0 0.0
        %133 = vmatprep.subr.mxu0 0.0
        %134 = vmatpush2.msra.mxu0 0.0
        %135 = vmatprep.subr.mxu0 0.0
        %136 = vmatpush2.msra.mxu0 0.0
        %137 = vmatprep.subr.mxu0 0.0
        %138 = vmatpush2.msra.mxu0 0.0
        %139 = vmatprep.subr.mxu0 0.0
        %140 = vmatpush2.msra.mxu0 0.0
        %141 = vmatprep.subr.mxu0 0.0
        %142 = vmatpush2.msra.mxu0 0.0
        %143 = vmatprep.subr.mxu0 0.0
        %144 = vmatpush2.msra.mxu0 0.0
        %145 = vmatprep.subr.mxu0 0.0
        %146 = vmatpush2.msra.mxu0 0.0
        %147 = vmatprep.subr.mxu0 0.0
        %148 = vmatpush2.msra.mxu0 0.0
        %149 = vmatprep.mubr.f32.mxu0 0.0
        %150 = vmatmul.mubr.f32.gmra.mxu0 %v61
        %v151 = vpop.f32.mrf.mxu0
        %v152 = vadd.f32 %v83, %v151
        %v153 = vpop.f32.mrf.mxu0
        %154 = vdwg.mxu0
        %v155 = vld [vmem:[#allocation2] sm:$0xff]
        %v156 = vadd.f32 %v51, %v152
        %v157 = vsub.f32 %v156, %v155
        %v158 = vmul.f32 %v157, 0.5
        %v159 = vadd.f32 %v155, %v158
        %160 = vst [vmem:[#allocation2] sm:$0xff] %v159
      $region33: #{tpu_custom_call.1} parent=24 // pred_fallthru
        _
      %v161 = vld [vmem:[#allocation2] sm:$0xff]
      %v162 = vtanh.pop %v161
      %163 = vst [vmem:[#allocation3] sm:$0xff] %v162
      %164 = vst [vmem:[#allocation9] sm:$0xff] %v162
      %p165 = scmp.eq.s32.totalorder %s46, 7
      // Predicated region
      $region34: #{tpu_custom_call.1} parent=24 // pred_check
        %p166 = pneg %p165
      $region35: #{tpu_custom_call.1} parent=24 // pred_check_branch
        %168 = sbr.rel (%p166) target = $region37
      $region36: #{tpu_custom_call.1} parent=24 // pred_region
        %v169 = vld [vmem:[#allocation2] sm:$0xff]
        %170 = vst [vmem:[#allocation10] sm:$0xff] %v169
      $region37: #{tpu_custom_call.1} parent=24 // pred_fallthru
        _
    $region25: #{tpu_custom_call.1} parent=1 // pred_fallthru
      _
    %s171 = sadd.s32 %s46, 1
    %p172 = scmp.lt.s32.totalorder %s171, 8
    // Predicated region
    $region38: #{tpu_custom_call.1} parent=1 // pred_check
      %p173 = pneg %p172
    $region39: #{tpu_custom_call.1} parent=1 // pred_check_branch
      %175 = sbr.rel (%p173) target = $region41
    $region40: #{tpu_custom_call.1} parent=1 // pred_region
      %s176 = scalar_lea.vmem [#allocation4], 8
      %v177 = vld [vmem:[%s176] sm:$0xff]
      %p178 = scmp.eq.s32.totalorder %s171, 0
      // Predicated region
      $region42: #{tpu_custom_call.1} parent=40 // pred_check
        %p179 = pneg %p178
      $region43: #{tpu_custom_call.1} parent=40 // pred_check_branch
        %181 = sbr.rel (%p179) target = $region45
      $region44: #{tpu_custom_call.1} parent=40 // pred_region
        %182 = vst [vmem:[#allocation2] sm:$0xff] %v177
      $region45: #{tpu_custom_call.1} parent=40 // pred_fallthru
        _
      %p183 = scmp.gt.s32.totalorder %s171, 0
      // Predicated region
      $region46: #{tpu_custom_call.1} parent=40 // pred_check
        %p184 = pneg %p183
      $region47: #{tpu_custom_call.1} parent=40 // pred_check_branch
        %186 = sbr.rel (%p184) target = $region49
      $region48: #{tpu_custom_call.1} parent=40 // pred_region
        %v187 = vld [vmem:[#allocation3] sm:$0xff]
        %v188 = vld [vmem:[#allocation7] sm:$0xff]
        %v189 = vld [vmem:[#allocation7 + $0x8] sm:$0xff]
        %v190 = vld [vmem:[#allocation7 + $0x10] sm:$0xff]
        %v191 = vld [vmem:[#allocation7 + $0x18] sm:$0xff]
        %v192 = vld [vmem:[#allocation7 + $0x20] sm:$0xff]
        %v193 = vld [vmem:[#allocation7 + $0x28] sm:$0xff]
        %v194 = vld [vmem:[#allocation7 + $0x30] sm:$0xff]
        %v195 = vld [vmem:[#allocation7 + $0x38] sm:$0xff]
        %v196 = vld [vmem:[#allocation7 + $0x40] sm:$0xff]
        %v197 = vld [vmem:[#allocation7 + $0x48] sm:$0xff]
        %v198 = vld [vmem:[#allocation7 + $0x50] sm:$0xff]
        %v199 = vld [vmem:[#allocation7 + $0x58] sm:$0xff]
        %v200 = vld [vmem:[#allocation7 + $0x60] sm:$0xff]
        %v201 = vld [vmem:[#allocation7 + $0x68] sm:$0xff]
        %v202 = vld [vmem:[#allocation7 + $0x70] sm:$0xff]
        %v203 = vld [vmem:[#allocation7 + $0x78] sm:$0xff]
        %v204 = vld [vmem:[%s2] sm:$0x1]
        %v206 = vlaneseq
        %v207 = vshrl.u32 %v206, 7
        %v208 = vsub.s32 0, %v207
        %v209 = vrot.slane %v204, %v208
        %211 = vmatprep.subr.mxu0 0.0
        %212 = vmatpush1.msra.mxu0 %v203
        %213 = vmatprep.subr.mxu0 0.0
        %214 = vmatpush1.msra.mxu0 %v202
        %215 = vmatprep.subr.mxu0 0.0
        %216 = vmatpush1.msra.mxu0 %v201
        %217 = vmatprep.subr.mxu0 0.0
        %218 = vmatpush1.msra.mxu0 %v200
        %219 = vmatprep.subr.mxu0 0.0
        %220 = vmatpush1.msra.mxu0 %v199
        %221 = vmatprep.subr.mxu0 0.0
        %222 = vmatpush1.msra.mxu0 %v198
        %223 = vmatprep.subr.mxu0 0.0
        %224 = vmatpush1.msra.mxu0 %v197
        %225 = vmatprep.subr.mxu0 0.0
        %226 = vmatpush1.msra.mxu0 %v196
        %227 = vmatprep.subr.mxu0 0.0
        %228 = vmatpush1.msra.mxu0 %v195
        %229 = vmatprep.subr.mxu0 0.0
        %230 = vmatpush1.msra.mxu0 %v194
        %231 = vmatprep.subr.mxu0 0.0
        %232 = vmatpush1.msra.mxu0 %v193
        %233 = vmatprep.subr.mxu0 0.0
        %234 = vmatpush1.msra.mxu0 %v192
        %235 = vmatprep.subr.mxu0 0.0
        %236 = vmatpush1.msra.mxu0 %v191
        %237 = vmatprep.subr.mxu0 0.0
        %238 = vmatpush1.msra.mxu0 %v190
        %239 = vmatprep.subr.mxu0 0.0
        %240 = vmatpush1.msra.mxu0 %v189
        %241 = vmatprep.subr.mxu0 0.0
        %242 = vmatpush1.msra.mxu0 %v188
        %243 = vmatprep.subr.mxu0 0.0
        %244 = vmatpush2.msra.mxu0 0.0
        %245 = vmatprep.subr.mxu0 0.0
        %246 = vmatpush2.msra.mxu0 0.0
        %247 = vmatprep.subr.mxu0 0.0
        %248 = vmatpush2.msra.mxu0 0.0
        %249 = vmatprep.subr.mxu0 0.0
        %250 = vmatpush2.msra.mxu0 0.0
        %251 = vmatprep.subr.mxu0 0.0
        %252 = vmatpush2.msra.mxu0 0.0
        %253 = vmatprep.subr.mxu0 0.0
        %254 = vmatpush2.msra.mxu0 0.0
        %255 = vmatprep.subr.mxu0 0.0
        %256 = vmatpush2.msra.mxu0 0.0
        %257 = vmatprep.subr.mxu0 0.0
        %258 = vmatpush2.msra.mxu0 0.0
        %259 = vmatprep.subr.mxu0 0.0
        %260 = vmatpush2.msra.mxu0 0.0
        %261 = vmatprep.subr.mxu0 0.0
        %262 = vmatpush2.msra.mxu0 0.0
        %263 = vmatprep.subr.mxu0 0.0
        %264 = vmatpush2.msra.mxu0 0.0
        %265 = vmatprep.subr.mxu0 0.0
        %266 = vmatpush2.msra.mxu0 0.0
        %267 = vmatprep.subr.mxu0 0.0
        %268 = vmatpush2.msra.mxu0 0.0
        %269 = vmatprep.subr.mxu0 0.0
        %270 = vmatpush2.msra.mxu0 0.0
        %271 = vmatprep.subr.mxu0 0.0
        %272 = vmatpush2.msra.mxu0 0.0
        %273 = vmatprep.subr.mxu0 0.0
        %274 = vmatpush2.msra.mxu0 0.0
        %275 = vmatprep.mubr.f32.mxu0 0.0
        %276 = vmatmul.mubr.f32.gmra.mxu0 %v187
        %v277 = vpop.f32.mrf.mxu0
        %v278 = vadd.f32 %v209, %v277
        %v279 = vpop.f32.mrf.mxu0
        %280 = vdwg.mxu0
        %v281 = vld [vmem:[#allocation2] sm:$0xff]
        %v282 = vadd.f32 %v177, %v278
        %v283 = vsub.f32 %v282, %v281
        %v284 = vmul.f32 %v283, 0.5
        %v285 = vadd.f32 %v281, %v284
        %286 = vst [vmem:[#allocation2] sm:$0xff] %v285
      $region49: #{tpu_custom_call.1} parent=40 // pred_fallthru
        _
      %v287 = vld [vmem:[#allocation2] sm:$0xff]
      %v288 = vtanh.pop %v287
      %289 = vst [vmem:[#allocation3] sm:$0xff] %v288
      %s290 = scalar_lea.vmem [#allocation9], 8
      %291 = vst [vmem:[%s290] sm:$0xff] %v288
      %p292 = scmp.eq.s32.totalorder %s171, 7
      // Predicated region
      $region50: #{tpu_custom_call.1} parent=40 // pred_check
        %p293 = pneg %p292
      $region51: #{tpu_custom_call.1} parent=40 // pred_check_branch
        %295 = sbr.rel (%p293) target = $region53
      $region52: #{tpu_custom_call.1} parent=40 // pred_region
        %v296 = vld [vmem:[#allocation2] sm:$0xff]
        %297 = vst [vmem:[#allocation10] sm:$0xff] %v296
      $region53: #{tpu_custom_call.1} parent=40 // pred_fallthru
        _
    $region41: #{tpu_custom_call.1} parent=1 // pred_fallthru
      _
    %s298 = sadd.s32 %s46, 2
    %p299 = scmp.lt.s32.totalorder %s298, 8
    // Predicated region
    $region54: #{tpu_custom_call.1} parent=1 // pred_check
      %p300 = pneg %p299
    $region55: #{tpu_custom_call.1} parent=1 // pred_check_branch
      %302 = sbr.rel (%p300) target = $region57
    $region56: #{tpu_custom_call.1} parent=1 // pred_region
      %s303 = scalar_lea.vmem [#allocation4], 16
      %v304 = vld [vmem:[%s303] sm:$0xff]
      %p305 = scmp.eq.s32.totalorder %s298, 0
      // Predicated region
      $region58: #{tpu_custom_call.1} parent=56 // pred_check
        %p306 = pneg %p305
      $region59: #{tpu_custom_call.1} parent=56 // pred_check_branch
        %308 = sbr.rel (%p306) target = $region61
      $region60: #{tpu_custom_call.1} parent=56 // pred_region
        %309 = vst [vmem:[#allocation2] sm:$0xff] %v304
      $region61: #{tpu_custom_call.1} parent=56 // pred_fallthru
        _
      %p310 = scmp.gt.s32.totalorder %s298, 0
      // Predicated region
      $region62: #{tpu_custom_call.1} parent=56 // pred_check
        %p311 = pneg %p310
      $region63: #{tpu_custom_call.1} parent=56 // pred_check_branch
        %313 = sbr.rel (%p311) target = $region65
      $region64: #{tpu_custom_call.1} parent=56 // pred_region
        %v314 = vld [vmem:[#allocation3] sm:$0xff]
        %v315 = vld [vmem:[#allocation7] sm:$0xff]
        %v316 = vld [vmem:[#allocation7 + $0x8] sm:$0xff]
        %v317 = vld [vmem:[#allocation7 + $0x10] sm:$0xff]
        %v318 = vld [vmem:[#allocation7 + $0x18] sm:$0xff]
        %v319 = vld [vmem:[#allocation7 + $0x20] sm:$0xff]
        %v320 = vld [vmem:[#allocation7 + $0x28] sm:$0xff]
        %v321 = vld [vmem:[#allocation7 + $0x30] sm:$0xff]
        %v322 = vld [vmem:[#allocation7 + $0x38] sm:$0xff]
        %v323 = vld [vmem:[#allocation7 + $0x40] sm:$0xff]
        %v324 = vld [vmem:[#allocation7 + $0x48] sm:$0xff]
        %v325 = vld [vmem:[#allocation7 + $0x50] sm:$0xff]
        %v326 = vld [vmem:[#allocation7 + $0x58] sm:$0xff]
        %v327 = vld [vmem:[#allocation7 + $0x60] sm:$0xff]
        %v328 = vld [vmem:[#allocation7 + $0x68] sm:$0xff]
        %v329 = vld [vmem:[#allocation7 + $0x70] sm:$0xff]
        %v330 = vld [vmem:[#allocation7 + $0x78] sm:$0xff]
        %v331 = vld [vmem:[%s2] sm:$0x1]
        %v333 = vlaneseq
        %v334 = vshrl.u32 %v333, 7
        %v335 = vsub.s32 0, %v334
        %v336 = vrot.slane %v331, %v335
        %338 = vmatprep.subr.mxu0 0.0
        %339 = vmatpush1.msra.mxu0 %v330
        %340 = vmatprep.subr.mxu0 0.0
        %341 = vmatpush1.msra.mxu0 %v329
        %342 = vmatprep.subr.mxu0 0.0
        %343 = vmatpush1.msra.mxu0 %v328
        %344 = vmatprep.subr.mxu0 0.0
        %345 = vmatpush1.msra.mxu0 %v327
        %346 = vmatprep.subr.mxu0 0.0
        %347 = vmatpush1.msra.mxu0 %v326
        %348 = vmatprep.subr.mxu0 0.0
        %349 = vmatpush1.msra.mxu0 %v325
        %350 = vmatprep.subr.mxu0 0.0
        %351 = vmatpush1.msra.mxu0 %v324
        %352 = vmatprep.subr.mxu0 0.0
        %353 = vmatpush1.msra.mxu0 %v323
        %354 = vmatprep.subr.mxu0 0.0
        %355 = vmatpush1.msra.mxu0 %v322
        %356 = vmatprep.subr.mxu0 0.0
        %357 = vmatpush1.msra.mxu0 %v321
        %358 = vmatprep.subr.mxu0 0.0
        %359 = vmatpush1.msra.mxu0 %v320
        %360 = vmatprep.subr.mxu0 0.0
        %361 = vmatpush1.msra.mxu0 %v319
        %362 = vmatprep.subr.mxu0 0.0
        %363 = vmatpush1.msra.mxu0 %v318
        %364 = vmatprep.subr.mxu0 0.0
        %365 = vmatpush1.msra.mxu0 %v317
        %366 = vmatprep.subr.mxu0 0.0
        %367 = vmatpush1.msra.mxu0 %v316
        %368 = vmatprep.subr.mxu0 0.0
        %369 = vmatpush1.msra.mxu0 %v315
        %370 = vmatprep.subr.mxu0 0.0
        %371 = vmatpush2.msra.mxu0 0.0
        %372 = vmatprep.subr.mxu0 0.0
        %373 = vmatpush2.msra.mxu0 0.0
        %374 = vmatprep.subr.mxu0 0.0
        %375 = vmatpush2.msra.mxu0 0.0
        %376 = vmatprep.subr.mxu0 0.0
        %377 = vmatpush2.msra.mxu0 0.0
        %378 = vmatprep.subr.mxu0 0.0
        %379 = vmatpush2.msra.mxu0 0.0
        %380 = vmatprep.subr.mxu0 0.0
        %381 = vmatpush2.msra.mxu0 0.0
        %382 = vmatprep.subr.mxu0 0.0
        %383 = vmatpush2.msra.mxu0 0.0
        %384 = vmatprep.subr.mxu0 0.0
        %385 = vmatpush2.msra.mxu0 0.0
        %386 = vmatprep.subr.mxu0 0.0
        %387 = vmatpush2.msra.mxu0 0.0
        %388 = vmatprep.subr.mxu0 0.0
        %389 = vmatpush2.msra.mxu0 0.0
        %390 = vmatprep.subr.mxu0 0.0
        %391 = vmatpush2.msra.mxu0 0.0
        %392 = vmatprep.subr.mxu0 0.0
        %393 = vmatpush2.msra.mxu0 0.0
        %394 = vmatprep.subr.mxu0 0.0
        %395 = vmatpush2.msra.mxu0 0.0
        %396 = vmatprep.subr.mxu0 0.0
        %397 = vmatpush2.msra.mxu0 0.0
        %398 = vmatprep.subr.mxu0 0.0
        %399 = vmatpush2.msra.mxu0 0.0
        %400 = vmatprep.subr.mxu0 0.0
        %401 = vmatpush2.msra.mxu0 0.0
        %402 = vmatprep.mubr.f32.mxu0 0.0
        %403 = vmatmul.mubr.f32.gmra.mxu0 %v314
        %v404 = vpop.f32.mrf.mxu0
        %v405 = vadd.f32 %v336, %v404
        %v406 = vpop.f32.mrf.mxu0
        %407 = vdwg.mxu0
        %v408 = vld [vmem:[#allocation2] sm:$0xff]
        %v409 = vadd.f32 %v304, %v405
        %v410 = vsub.f32 %v409, %v408
        %v411 = vmul.f32 %v410, 0.5
        %v412 = vadd.f32 %v408, %v411
        %413 = vst [vmem:[#allocation2] sm:$0xff] %v412
      $region65: #{tpu_custom_call.1} parent=56 // pred_fallthru
        _
      %v414 = vld [vmem:[#allocation2] sm:$0xff]
      %v415 = vtanh.pop %v414
      %416 = vst [vmem:[#allocation3] sm:$0xff] %v415
      %s417 = scalar_lea.vmem [#allocation9], 16
      %418 = vst [vmem:[%s417] sm:$0xff] %v415
      %p419 = scmp.eq.s32.totalorder %s298, 7
      // Predicated region
      $region66: #{tpu_custom_call.1} parent=56 // pred_check
        %p420 = pneg %p419
      $region67: #{tpu_custom_call.1} parent=56 // pred_check_branch
        %422 = sbr.rel (%p420) target = $region69
      $region68: #{tpu_custom_call.1} parent=56 // pred_region
        %v423 = vld [vmem:[#allocation2] sm:$0xff]
        %424 = vst [vmem:[#allocation10] sm:$0xff] %v423
      $region69: #{tpu_custom_call.1} parent=56 // pred_fallthru
        _
    $region57: #{tpu_custom_call.1} parent=1 // pred_fallthru
      _
    %s425 = sadd.s32 %s46, 3
    %p426 = scmp.lt.s32.totalorder %s425, 8
    // Predicated region
    $region70: #{tpu_custom_call.1} parent=1 // pred_check
      %p427 = pneg %p426
    $region71: #{tpu_custom_call.1} parent=1 // pred_check_branch
      %429 = sbr.rel (%p427) target = $region73
    $region72: #{tpu_custom_call.1} parent=1 // pred_region
      %s430 = scalar_lea.vmem [#allocation4], 24
      %v431 = vld [vmem:[%s430] sm:$0xff]
      %p432 = scmp.eq.s32.totalorder %s425, 0
      // Predicated region
      $region74: #{tpu_custom_call.1} parent=72 // pred_check
        %p433 = pneg %p432
      $region75: #{tpu_custom_call.1} parent=72 // pred_check_branch
        %435 = sbr.rel (%p433) target = $region77
      $region76: #{tpu_custom_call.1} parent=72 // pred_region
        %436 = vst [vmem:[#allocation2] sm:$0xff] %v431
      $region77: #{tpu_custom_call.1} parent=72 // pred_fallthru
        _
      %p437 = scmp.gt.s32.totalorder %s425, 0
      // Predicated region
      $region78: #{tpu_custom_call.1} parent=72 // pred_check
        %p438 = pneg %p437
      $region79: #{tpu_custom_call.1} parent=72 // pred_check_branch
        %440 = sbr.rel (%p438) target = $region81
      $region80: #{tpu_custom_call.1} parent=72 // pred_region
        %v441 = vld [vmem:[#allocation3] sm:$0xff]
        %v442 = vld [vmem:[#allocation7] sm:$0xff]
        %v443 = vld [vmem:[#allocation7 + $0x8] sm:$0xff]
        %v444 = vld [vmem:[#allocation7 + $0x10] sm:$0xff]
        %v445 = vld [vmem:[#allocation7 + $0x18] sm:$0xff]
        %v446 = vld [vmem:[#allocation7 + $0x20] sm:$0xff]
        %v447 = vld [vmem:[#allocation7 + $0x28] sm:$0xff]
        %v448 = vld [vmem:[#allocation7 + $0x30] sm:$0xff]
        %v449 = vld [vmem:[#allocation7 + $0x38] sm:$0xff]
        %v450 = vld [vmem:[#allocation7 + $0x40] sm:$0xff]
        %v451 = vld [vmem:[#allocation7 + $0x48] sm:$0xff]
        %v452 = vld [vmem:[#allocation7 + $0x50] sm:$0xff]
        %v453 = vld [vmem:[#allocation7 + $0x58] sm:$0xff]
        %v454 = vld [vmem:[#allocation7 + $0x60] sm:$0xff]
        %v455 = vld [vmem:[#allocation7 + $0x68] sm:$0xff]
        %v456 = vld [vmem:[#allocation7 + $0x70] sm:$0xff]
        %v457 = vld [vmem:[#allocation7 + $0x78] sm:$0xff]
        %v458 = vld [vmem:[%s2] sm:$0x1]
        %v460 = vlaneseq
        %v461 = vshrl.u32 %v460, 7
        %v462 = vsub.s32 0, %v461
        %v463 = vrot.slane %v458, %v462
        %465 = vmatprep.subr.mxu0 0.0
        %466 = vmatpush1.msra.mxu0 %v457
        %467 = vmatprep.subr.mxu0 0.0
        %468 = vmatpush1.msra.mxu0 %v456
        %469 = vmatprep.subr.mxu0 0.0
        %470 = vmatpush1.msra.mxu0 %v455
        %471 = vmatprep.subr.mxu0 0.0
        %472 = vmatpush1.msra.mxu0 %v454
        %473 = vmatprep.subr.mxu0 0.0
        %474 = vmatpush1.msra.mxu0 %v453
        %475 = vmatprep.subr.mxu0 0.0
        %476 = vmatpush1.msra.mxu0 %v452
        %477 = vmatprep.subr.mxu0 0.0
        %478 = vmatpush1.msra.mxu0 %v451
        %479 = vmatprep.subr.mxu0 0.0
        %480 = vmatpush1.msra.mxu0 %v450
        %481 = vmatprep.subr.mxu0 0.0
        %482 = vmatpush1.msra.mxu0 %v449
        %483 = vmatprep.subr.mxu0 0.0
        %484 = vmatpush1.msra.mxu0 %v448
        %485 = vmatprep.subr.mxu0 0.0
        %486 = vmatpush1.msra.mxu0 %v447
        %487 = vmatprep.subr.mxu0 0.0
        %488 = vmatpush1.msra.mxu0 %v446
        %489 = vmatprep.subr.mxu0 0.0
        %490 = vmatpush1.msra.mxu0 %v445
        %491 = vmatprep.subr.mxu0 0.0
        %492 = vmatpush1.msra.mxu0 %v444
        %493 = vmatprep.subr.mxu0 0.0
        %494 = vmatpush1.msra.mxu0 %v443
        %495 = vmatprep.subr.mxu0 0.0
        %496 = vmatpush1.msra.mxu0 %v442
        %497 = vmatprep.subr.mxu0 0.0
        %498 = vmatpush2.msra.mxu0 0.0
        %499 = vmatprep.subr.mxu0 0.0
        %500 = vmatpush2.msra.mxu0 0.0
        %501 = vmatprep.subr.mxu0 0.0
        %502 = vmatpush2.msra.mxu0 0.0
        %503 = vmatprep.subr.mxu0 0.0
        %504 = vmatpush2.msra.mxu0 0.0
        %505 = vmatprep.subr.mxu0 0.0
        %506 = vmatpush2.msra.mxu0 0.0
        %507 = vmatprep.subr.mxu0 0.0
        %508 = vmatpush2.msra.mxu0 0.0
        %509 = vmatprep.subr.mxu0 0.0
        %510 = vmatpush2.msra.mxu0 0.0
        %511 = vmatprep.subr.mxu0 0.0
        %512 = vmatpush2.msra.mxu0 0.0
        %513 = vmatprep.subr.mxu0 0.0
        %514 = vmatpush2.msra.mxu0 0.0
        %515 = vmatprep.subr.mxu0 0.0
        %516 = vmatpush2.msra.mxu0 0.0
        %517 = vmatprep.subr.mxu0 0.0
        %518 = vmatpush2.msra.mxu0 0.0
        %519 = vmatprep.subr.mxu0 0.0
        %520 = vmatpush2.msra.mxu0 0.0
        %521 = vmatprep.subr.mxu0 0.0
        %522 = vmatpush2.msra.mxu0 0.0
        %523 = vmatprep.subr.mxu0 0.0
        %524 = vmatpush2.msra.mxu0 0.0
        %525 = vmatprep.subr.mxu0 0.0
        %526 = vmatpush2.msra.mxu0 0.0
        %527 = vmatprep.subr.mxu0 0.0
        %528 = vmatpush2.msra.mxu0 0.0
        %529 = vmatprep.mubr.f32.mxu0 0.0
        %530 = vmatmul.mubr.f32.gmra.mxu0 %v441
        %v531 = vpop.f32.mrf.mxu0
        %v532 = vadd.f32 %v463, %v531
        %v533 = vpop.f32.mrf.mxu0
        %534 = vdwg.mxu0
        %v535 = vld [vmem:[#allocation2] sm:$0xff]
        %v536 = vadd.f32 %v431, %v532
        %v537 = vsub.f32 %v536, %v535
        %v538 = vmul.f32 %v537, 0.5
        %v539 = vadd.f32 %v535, %v538
        %540 = vst [vmem:[#allocation2] sm:$0xff] %v539
      $region81: #{tpu_custom_call.1} parent=72 // pred_fallthru
        _
      %v541 = vld [vmem:[#allocation2] sm:$0xff]
      %v542 = vtanh.pop %v541
      %543 = vst [vmem:[#allocation3] sm:$0xff] %v542
      %s544 = scalar_lea.vmem [#allocation9], 24
      %545 = vst [vmem:[%s544] sm:$0xff] %v542
      %p546 = scmp.eq.s32.totalorder %s425, 7
      // Predicated region
      $region82: #{tpu_custom_call.1} parent=72 // pred_check
        %p547 = pneg %p546
      $region83: #{tpu_custom_call.1} parent=72 // pred_check_branch
        %549 = sbr.rel (%p547) target = $region85
      $region84: #{tpu_custom_call.1} parent=72 // pred_region
        %v550 = vld [vmem:[#allocation2] sm:$0xff]
        %551 = vst [vmem:[#allocation10] sm:$0xff] %v550
      $region85: #{tpu_custom_call.1} parent=72 // pred_fallthru
        _
    $region73: #{tpu_custom_call.1} parent=1 // pred_fallthru
      _
    %s552 = sadd.s32 %s46, 4
    %p553 = scmp.lt.s32.totalorder %s552, 8
    // Predicated region
    $region86: #{tpu_custom_call.1} parent=1 // pred_check
      %p554 = pneg %p553
    $region87: #{tpu_custom_call.1} parent=1 // pred_check_branch
      %556 = sbr.rel (%p554) target = $region89
    $region88: #{tpu_custom_call.1} parent=1 // pred_region
      %s557 = scalar_lea.vmem [#allocation4], 32
      %v558 = vld [vmem:[%s557] sm:$0xff]
      %p559 = scmp.eq.s32.totalorder %s552, 0
      // Predicated region
      $region90: #{tpu_custom_call.1} parent=88 // pred_check
        %p560 = pneg %p559
      $region91: #{tpu_custom_call.1} parent=88 // pred_check_branch
        %562 = sbr.rel (%p560) target = $region93
      $region92: #{tpu_custom_call.1} parent=88 // pred_region
        %563 = vst [vmem:[#allocation2] sm:$0xff] %v558
      $region93: #{tpu_custom_call.1} parent=88 // pred_fallthru
        _
      %p564 = scmp.gt.s32.totalorder %s552, 0
      // Predicated region
      $region94: #{tpu_custom_call.1} parent=88 // pred_check
        %p565 = pneg %p564
      $region95: #{tpu_custom_call.1} parent=88 // pred_check_branch
        %567 = sbr.rel (%p565) target = $region97
      $region96: #{tpu_custom_call.1} parent=88 // pred_region
        %v568 = vld [vmem:[#allocation3] sm:$0xff]
        %v569 = vld [vmem:[#allocation7] sm:$0xff]
        %v570 = vld [vmem:[#allocation7 + $0x8] sm:$0xff]
        %v571 = vld [vmem:[#allocation7 + $0x10] sm:$0xff]
        %v572 = vld [vmem:[#allocation7 + $0x18] sm:$0xff]
        %v573 = vld [vmem:[#allocation7 + $0x20] sm:$0xff]
        %v574 = vld [vmem:[#allocation7 + $0x28] sm:$0xff]
        %v575 = vld [vmem:[#allocation7 + $0x30] sm:$0xff]
        %v576 = vld [vmem:[#allocation7 + $0x38] sm:$0xff]
        %v577 = vld [vmem:[#allocation7 + $0x40] sm:$0xff]
        %v578 = vld [vmem:[#allocation7 + $0x48] sm:$0xff]
        %v579 = vld [vmem:[#allocation7 + $0x50] sm:$0xff]
        %v580 = vld [vmem:[#allocation7 + $0x58] sm:$0xff]
        %v581 = vld [vmem:[#allocation7 + $0x60] sm:$0xff]
        %v582 = vld [vmem:[#allocation7 + $0x68] sm:$0xff]
        %v583 = vld [vmem:[#allocation7 + $0x70] sm:$0xff]
        %v584 = vld [vmem:[#allocation7 + $0x78] sm:$0xff]
        %v585 = vld [vmem:[%s2] sm:$0x1]
        %v587 = vlaneseq
        %v588 = vshrl.u32 %v587, 7
        %v589 = vsub.s32 0, %v588
        %v590 = vrot.slane %v585, %v589
        %592 = vmatprep.subr.mxu0 0.0
        %593 = vmatpush1.msra.mxu0 %v584
        %594 = vmatprep.subr.mxu0 0.0
        %595 = vmatpush1.msra.mxu0 %v583
        %596 = vmatprep.subr.mxu0 0.0
        %597 = vmatpush1.msra.mxu0 %v582
        %598 = vmatprep.subr.mxu0 0.0
        %599 = vmatpush1.msra.mxu0 %v581
        %600 = vmatprep.subr.mxu0 0.0
        %601 = vmatpush1.msra.mxu0 %v580
        %602 = vmatprep.subr.mxu0 0.0
        %603 = vmatpush1.msra.mxu0 %v579
        %604 = vmatprep.subr.mxu0 0.0
        %605 = vmatpush1.msra.mxu0 %v578
        %606 = vmatprep.subr.mxu0 0.0
        %607 = vmatpush1.msra.mxu0 %v577
        %608 = vmatprep.subr.mxu0 0.0
        %609 = vmatpush1.msra.mxu0 %v576
        %610 = vmatprep.subr.mxu0 0.0
        %611 = vmatpush1.msra.mxu0 %v575
        %612 = vmatprep.subr.mxu0 0.0
        %613 = vmatpush1.msra.mxu0 %v574
        %614 = vmatprep.subr.mxu0 0.0
        %615 = vmatpush1.msra.mxu0 %v573
        %616 = vmatprep.subr.mxu0 0.0
        %617 = vmatpush1.msra.mxu0 %v572
        %618 = vmatprep.subr.mxu0 0.0
        %619 = vmatpush1.msra.mxu0 %v571
        %620 = vmatprep.subr.mxu0 0.0
        %621 = vmatpush1.msra.mxu0 %v570
        %622 = vmatprep.subr.mxu0 0.0
        %623 = vmatpush1.msra.mxu0 %v569
        %624 = vmatprep.subr.mxu0 0.0
        %625 = vmatpush2.msra.mxu0 0.0
        %626 = vmatprep.subr.mxu0 0.0
        %627 = vmatpush2.msra.mxu0 0.0
        %628 = vmatprep.subr.mxu0 0.0
        %629 = vmatpush2.msra.mxu0 0.0
        %630 = vmatprep.subr.mxu0 0.0
        %631 = vmatpush2.msra.mxu0 0.0
        %632 = vmatprep.subr.mxu0 0.0
        %633 = vmatpush2.msra.mxu0 0.0
        %634 = vmatprep.subr.mxu0 0.0
        %635 = vmatpush2.msra.mxu0 0.0
        %636 = vmatprep.subr.mxu0 0.0
        %637 = vmatpush2.msra.mxu0 0.0
        %638 = vmatprep.subr.mxu0 0.0
        %639 = vmatpush2.msra.mxu0 0.0
        %640 = vmatprep.subr.mxu0 0.0
        %641 = vmatpush2.msra.mxu0 0.0
        %642 = vmatprep.subr.mxu0 0.0
        %643 = vmatpush2.msra.mxu0 0.0
        %644 = vmatprep.subr.mxu0 0.0
        %645 = vmatpush2.msra.mxu0 0.0
        %646 = vmatprep.subr.mxu0 0.0
        %647 = vmatpush2.msra.mxu0 0.0
        %648 = vmatprep.subr.mxu0 0.0
        %649 = vmatpush2.msra.mxu0 0.0
        %650 = vmatprep.subr.mxu0 0.0
        %651 = vmatpush2.msra.mxu0 0.0
        %652 = vmatprep.subr.mxu0 0.0
        %653 = vmatpush2.msra.mxu0 0.0
        %654 = vmatprep.subr.mxu0 0.0
        %655 = vmatpush2.msra.mxu0 0.0
        %656 = vmatprep.mubr.f32.mxu0 0.0
        %657 = vmatmul.mubr.f32.gmra.mxu0 %v568
        %v658 = vpop.f32.mrf.mxu0
        %v659 = vadd.f32 %v590, %v658
        %v660 = vpop.f32.mrf.mxu0
        %661 = vdwg.mxu0
        %v662 = vld [vmem:[#allocation2] sm:$0xff]
        %v663 = vadd.f32 %v558, %v659
        %v664 = vsub.f32 %v663, %v662
        %v665 = vmul.f32 %v664, 0.5
        %v666 = vadd.f32 %v662, %v665
        %667 = vst [vmem:[#allocation2] sm:$0xff] %v666
      $region97: #{tpu_custom_call.1} parent=88 // pred_fallthru
        _
      %v668 = vld [vmem:[#allocation2] sm:$0xff]
      %v669 = vtanh.pop %v668
      %670 = vst [vmem:[#allocation3] sm:$0xff] %v669
      %s671 = scalar_lea.vmem [#allocation9], 32
      %672 = vst [vmem:[%s671] sm:$0xff] %v669
      %p673 = scmp.eq.s32.totalorder %s552, 7
      // Predicated region
      $region98: #{tpu_custom_call.1} parent=88 // pred_check
        %p674 = pneg %p673
      $region99: #{tpu_custom_call.1} parent=88 // pred_check_branch
        %676 = sbr.rel (%p674) target = $region101
      $region100: #{tpu_custom_call.1} parent=88 // pred_region
        %v677 = vld [vmem:[#allocation2] sm:$0xff]
        %678 = vst [vmem:[#allocation10] sm:$0xff] %v677
      $region101: #{tpu_custom_call.1} parent=88 // pred_fallthru
        _
    $region89: #{tpu_custom_call.1} parent=1 // pred_fallthru
      _
    %s679 = sadd.s32 %s46, 5
    %p680 = scmp.lt.s32.totalorder %s679, 8
    // Predicated region
    $region102: #{tpu_custom_call.1} parent=1 // pred_check
      %p681 = pneg %p680
    $region103: #{tpu_custom_call.1} parent=1 // pred_check_branch
      %683 = sbr.rel (%p681) target = $region105
    $region104: #{tpu_custom_call.1} parent=1 // pred_region
      %s684 = scalar_lea.vmem [#allocation4], 40
      %v685 = vld [vmem:[%s684] sm:$0xff]
      %p686 = scmp.eq.s32.totalorder %s679, 0
      // Predicated region
      $region106: #{tpu_custom_call.1} parent=104 // pred_check
        %p687 = pneg %p686
      $region107: #{tpu_custom_call.1} parent=104 // pred_check_branch
        %689 = sbr.rel (%p687) target = $region109
      $region108: #{tpu_custom_call.1} parent=104 // pred_region
        %690 = vst [vmem:[#allocation2] sm:$0xff] %v685
      $region109: #{tpu_custom_call.1} parent=104 // pred_fallthru
        _
      %p691 = scmp.gt.s32.totalorder %s679, 0
      // Predicated region
      $region110: #{tpu_custom_call.1} parent=104 // pred_check
        %p692 = pneg %p691
      $region111: #{tpu_custom_call.1} parent=104 // pred_check_branch
        %694 = sbr.rel (%p692) target = $region113
      $region112: #{tpu_custom_call.1} parent=104 // pred_region
        %v695 = vld [vmem:[#allocation3] sm:$0xff]
        %v696 = vld [vmem:[#allocation7] sm:$0xff]
        %v697 = vld [vmem:[#allocation7 + $0x8] sm:$0xff]
        %v698 = vld [vmem:[#allocation7 + $0x10] sm:$0xff]
        %v699 = vld [vmem:[#allocation7 + $0x18] sm:$0xff]
        %v700 = vld [vmem:[#allocation7 + $0x20] sm:$0xff]
        %v701 = vld [vmem:[#allocation7 + $0x28] sm:$0xff]
        %v702 = vld [vmem:[#allocation7 + $0x30] sm:$0xff]
        %v703 = vld [vmem:[#allocation7 + $0x38] sm:$0xff]
        %v704 = vld [vmem:[#allocation7 + $0x40] sm:$0xff]
        %v705 = vld [vmem:[#allocation7 + $0x48] sm:$0xff]
        %v706 = vld [vmem:[#allocation7 + $0x50] sm:$0xff]
        %v707 = vld [vmem:[#allocation7 + $0x58] sm:$0xff]
        %v708 = vld [vmem:[#allocation7 + $0x60] sm:$0xff]
        %v709 = vld [vmem:[#allocation7 + $0x68] sm:$0xff]
        %v710 = vld [vmem:[#allocation7 + $0x70] sm:$0xff]
        %v711 = vld [vmem:[#allocation7 + $0x78] sm:$0xff]
        %v712 = vld [vmem:[%s2] sm:$0x1]
        %v714 = vlaneseq
        %v715 = vshrl.u32 %v714, 7
        %v716 = vsub.s32 0, %v715
        %v717 = vrot.slane %v712, %v716
        %719 = vmatprep.subr.mxu0 0.0
        %720 = vmatpush1.msra.mxu0 %v711
        %721 = vmatprep.subr.mxu0 0.0
        %722 = vmatpush1.msra.mxu0 %v710
        %723 = vmatprep.subr.mxu0 0.0
        %724 = vmatpush1.msra.mxu0 %v709
        %725 = vmatprep.subr.mxu0 0.0
        %726 = vmatpush1.msra.mxu0 %v708
        %727 = vmatprep.subr.mxu0 0.0
        %728 = vmatpush1.msra.mxu0 %v707
        %729 = vmatprep.subr.mxu0 0.0
        %730 = vmatpush1.msra.mxu0 %v706
        %731 = vmatprep.subr.mxu0 0.0
        %732 = vmatpush1.msra.mxu0 %v705
        %733 = vmatprep.subr.mxu0 0.0
        %734 = vmatpush1.msra.mxu0 %v704
        %735 = vmatprep.subr.mxu0 0.0
        %736 = vmatpush1.msra.mxu0 %v703
        %737 = vmatprep.subr.mxu0 0.0
        %738 = vmatpush1.msra.mxu0 %v702
        %739 = vmatprep.subr.mxu0 0.0
        %740 = vmatpush1.msra.mxu0 %v701
        %741 = vmatprep.subr.mxu0 0.0
        %742 = vmatpush1.msra.mxu0 %v700
        %743 = vmatprep.subr.mxu0 0.0
        %744 = vmatpush1.msra.mxu0 %v699
        %745 = vmatprep.subr.mxu0 0.0
        %746 = vmatpush1.msra.mxu0 %v698
        %747 = vmatprep.subr.mxu0 0.0
        %748 = vmatpush1.msra.mxu0 %v697
        %749 = vmatprep.subr.mxu0 0.0
        %750 = vmatpush1.msra.mxu0 %v696
        %751 = vmatprep.subr.mxu0 0.0
        %752 = vmatpush2.msra.mxu0 0.0
        %753 = vmatprep.subr.mxu0 0.0
        %754 = vmatpush2.msra.mxu0 0.0
        %755 = vmatprep.subr.mxu0 0.0
        %756 = vmatpush2.msra.mxu0 0.0
        %757 = vmatprep.subr.mxu0 0.0
        %758 = vmatpush2.msra.mxu0 0.0
        %759 = vmatprep.subr.mxu0 0.0
        %760 = vmatpush2.msra.mxu0 0.0
        %761 = vmatprep.subr.mxu0 0.0
        %762 = vmatpush2.msra.mxu0 0.0
        %763 = vmatprep.subr.mxu0 0.0
        %764 = vmatpush2.msra.mxu0 0.0
        %765 = vmatprep.subr.mxu0 0.0
        %766 = vmatpush2.msra.mxu0 0.0
        %767 = vmatprep.subr.mxu0 0.0
        %768 = vmatpush2.msra.mxu0 0.0
        %769 = vmatprep.subr.mxu0 0.0
        %770 = vmatpush2.msra.mxu0 0.0
        %771 = vmatprep.subr.mxu0 0.0
        %772 = vmatpush2.msra.mxu0 0.0
        %773 = vmatprep.subr.mxu0 0.0
        %774 = vmatpush2.msra.mxu0 0.0
        %775 = vmatprep.subr.mxu0 0.0
        %776 = vmatpush2.msra.mxu0 0.0
        %777 = vmatprep.subr.mxu0 0.0
        %778 = vmatpush2.msra.mxu0 0.0
        %779 = vmatprep.subr.mxu0 0.0
        %780 = vmatpush2.msra.mxu0 0.0
        %781 = vmatprep.subr.mxu0 0.0
        %782 = vmatpush2.msra.mxu0 0.0
        %783 = vmatprep.mubr.f32.mxu0 0.0
        %784 = vmatmul.mubr.f32.gmra.mxu0 %v695
        %v785 = vpop.f32.mrf.mxu0
        %v786 = vadd.f32 %v717, %v785
        %v787 = vpop.f32.mrf.mxu0
        %788 = vdwg.mxu0
        %v789 = vld [vmem:[#allocation2] sm:$0xff]
        %v790 = vadd.f32 %v685, %v786
        %v791 = vsub.f32 %v790, %v789
        %v792 = vmul.f32 %v791, 0.5
        %v793 = vadd.f32 %v789, %v792
        %794 = vst [vmem:[#allocation2] sm:$0xff] %v793
      $region113: #{tpu_custom_call.1} parent=104 // pred_fallthru
        _
      %v795 = vld [vmem:[#allocation2] sm:$0xff]
      %v796 = vtanh.pop %v795
      %797 = vst [vmem:[#allocation3] sm:$0xff] %v796
      %s798 = scalar_lea.vmem [#allocation9], 40
      %799 = vst [vmem:[%s798] sm:$0xff] %v796
      %p800 = scmp.eq.s32.totalorder %s679, 7
      // Predicated region
      $region114: #{tpu_custom_call.1} parent=104 // pred_check
        %p801 = pneg %p800
      $region115: #{tpu_custom_call.1} parent=104 // pred_check_branch
        %803 = sbr.rel (%p801) target = $region117
      $region116: #{tpu_custom_call.1} parent=104 // pred_region
        %v804 = vld [vmem:[#allocation2] sm:$0xff]
        %805 = vst [vmem:[#allocation10] sm:$0xff] %v804
      $region117: #{tpu_custom_call.1} parent=104 // pred_fallthru
        _
    $region105: #{tpu_custom_call.1} parent=1 // pred_fallthru
      _
    %s806 = sadd.s32 %s46, 6
    %p807 = scmp.lt.s32.totalorder %s806, 8
    // Predicated region
    $region118: #{tpu_custom_call.1} parent=1 // pred_check
      %p808 = pneg %p807
    $region119: #{tpu_custom_call.1} parent=1 // pred_check_branch
      %810 = sbr.rel (%p808) target = $region121
    $region120: #{tpu_custom_call.1} parent=1 // pred_region
      %s811 = scalar_lea.vmem [#allocation4], 48
      %v812 = vld [vmem:[%s811] sm:$0xff]
      %p813 = scmp.eq.s32.totalorder %s806, 0
      // Predicated region
      $region122: #{tpu_custom_call.1} parent=120 // pred_check
        %p814 = pneg %p813
      $region123: #{tpu_custom_call.1} parent=120 // pred_check_branch
        %816 = sbr.rel (%p814) target = $region125
      $region124: #{tpu_custom_call.1} parent=120 // pred_region
        %817 = vst [vmem:[#allocation2] sm:$0xff] %v812
      $region125: #{tpu_custom_call.1} parent=120 // pred_fallthru
        _
      %p818 = scmp.gt.s32.totalorder %s806, 0
      // Predicated region
      $region126: #{tpu_custom_call.1} parent=120 // pred_check
        %p819 = pneg %p818
      $region127: #{tpu_custom_call.1} parent=120 // pred_check_branch
        %821 = sbr.rel (%p819) target = $region129
      $region128: #{tpu_custom_call.1} parent=120 // pred_region
        %v822 = vld [vmem:[#allocation3] sm:$0xff]
        %v823 = vld [vmem:[#allocation7] sm:$0xff]
        %v824 = vld [vmem:[#allocation7 + $0x8] sm:$0xff]
        %v825 = vld [vmem:[#allocation7 + $0x10] sm:$0xff]
        %v826 = vld [vmem:[#allocation7 + $0x18] sm:$0xff]
        %v827 = vld [vmem:[#allocation7 + $0x20] sm:$0xff]
        %v828 = vld [vmem:[#allocation7 + $0x28] sm:$0xff]
        %v829 = vld [vmem:[#allocation7 + $0x30] sm:$0xff]
        %v830 = vld [vmem:[#allocation7 + $0x38] sm:$0xff]
        %v831 = vld [vmem:[#allocation7 + $0x40] sm:$0xff]
        %v832 = vld [vmem:[#allocation7 + $0x48] sm:$0xff]
        %v833 = vld [vmem:[#allocation7 + $0x50] sm:$0xff]
        %v834 = vld [vmem:[#allocation7 + $0x58] sm:$0xff]
        %v835 = vld [vmem:[#allocation7 + $0x60] sm:$0xff]
        %v836 = vld [vmem:[#allocation7 + $0x68] sm:$0xff]
        %v837 = vld [vmem:[#allocation7 + $0x70] sm:$0xff]
        %v838 = vld [vmem:[#allocation7 + $0x78] sm:$0xff]
        %v839 = vld [vmem:[%s2] sm:$0x1]
        %v841 = vlaneseq
        %v842 = vshrl.u32 %v841, 7
        %v843 = vsub.s32 0, %v842
        %v844 = vrot.slane %v839, %v843
        %846 = vmatprep.subr.mxu0 0.0
        %847 = vmatpush1.msra.mxu0 %v838
        %848 = vmatprep.subr.mxu0 0.0
        %849 = vmatpush1.msra.mxu0 %v837
        %850 = vmatprep.subr.mxu0 0.0
        %851 = vmatpush1.msra.mxu0 %v836
        %852 = vmatprep.subr.mxu0 0.0
        %853 = vmatpush1.msra.mxu0 %v835
        %854 = vmatprep.subr.mxu0 0.0
        %855 = vmatpush1.msra.mxu0 %v834
        %856 = vmatprep.subr.mxu0 0.0
        %857 = vmatpush1.msra.mxu0 %v833
        %858 = vmatprep.subr.mxu0 0.0
        %859 = vmatpush1.msra.mxu0 %v832
        %860 = vmatprep.subr.mxu0 0.0
        %861 = vmatpush1.msra.mxu0 %v831
        %862 = vmatprep.subr.mxu0 0.0
        %863 = vmatpush1.msra.mxu0 %v830
        %864 = vmatprep.subr.mxu0 0.0
        %865 = vmatpush1.msra.mxu0 %v829
        %866 = vmatprep.subr.mxu0 0.0
        %867 = vmatpush1.msra.mxu0 %v828
        %868 = vmatprep.subr.mxu0 0.0
        %869 = vmatpush1.msra.mxu0 %v827
        %870 = vmatprep.subr.mxu0 0.0
        %871 = vmatpush1.msra.mxu0 %v826
        %872 = vmatprep.subr.mxu0 0.0
        %873 = vmatpush1.msra.mxu0 %v825
        %874 = vmatprep.subr.mxu0 0.0
        %875 = vmatpush1.msra.mxu0 %v824
        %876 = vmatprep.subr.mxu0 0.0
        %877 = vmatpush1.msra.mxu0 %v823
        %878 = vmatprep.subr.mxu0 0.0
        %879 = vmatpush2.msra.mxu0 0.0
        %880 = vmatprep.subr.mxu0 0.0
        %881 = vmatpush2.msra.mxu0 0.0
        %882 = vmatprep.subr.mxu0 0.0
        %883 = vmatpush2.msra.mxu0 0.0
        %884 = vmatprep.subr.mxu0 0.0
        %885 = vmatpush2.msra.mxu0 0.0
        %886 = vmatprep.subr.mxu0 0.0
        %887 = vmatpush2.msra.mxu0 0.0
        %888 = vmatprep.subr.mxu0 0.0
        %889 = vmatpush2.msra.mxu0 0.0
        %890 = vmatprep.subr.mxu0 0.0
        %891 = vmatpush2.msra.mxu0 0.0
        %892 = vmatprep.subr.mxu0 0.0
        %893 = vmatpush2.msra.mxu0 0.0
        %894 = vmatprep.subr.mxu0 0.0
        %895 = vmatpush2.msra.mxu0 0.0
        %896 = vmatprep.subr.mxu0 0.0
        %897 = vmatpush2.msra.mxu0 0.0
        %898 = vmatprep.subr.mxu0 0.0
        %899 = vmatpush2.msra.mxu0 0.0
        %900 = vmatprep.subr.mxu0 0.0
        %901 = vmatpush2.msra.mxu0 0.0
        %902 = vmatprep.subr.mxu0 0.0
        %903 = vmatpush2.msra.mxu0 0.0
        %904 = vmatprep.subr.mxu0 0.0
        %905 = vmatpush2.msra.mxu0 0.0
        %906 = vmatprep.subr.mxu0 0.0
        %907 = vmatpush2.msra.mxu0 0.0
        %908 = vmatprep.subr.mxu0 0.0
        %909 = vmatpush2.msra.mxu0 0.0
        %910 = vmatprep.mubr.f32.mxu0 0.0
        %911 = vmatmul.mubr.f32.gmra.mxu0 %v822
        %v912 = vpop.f32.mrf.mxu0
        %v913 = vadd.f32 %v844, %v912
        %v914 = vpop.f32.mrf.mxu0
        %915 = vdwg.mxu0
        %v916 = vld [vmem:[#allocation2] sm:$0xff]
        %v917 = vadd.f32 %v812, %v913
        %v918 = vsub.f32 %v917, %v916
        %v919 = vmul.f32 %v918, 0.5
        %v920 = vadd.f32 %v916, %v919
        %921 = vst [vmem:[#allocation2] sm:$0xff] %v920
      $region129: #{tpu_custom_call.1} parent=120 // pred_fallthru
        _
      %v922 = vld [vmem:[#allocation2] sm:$0xff]
      %v923 = vtanh.pop %v922
      %924 = vst [vmem:[#allocation3] sm:$0xff] %v923
      %s925 = scalar_lea.vmem [#allocation9], 48
      %926 = vst [vmem:[%s925] sm:$0xff] %v923
      %p927 = scmp.eq.s32.totalorder %s806, 7
      // Predicated region
      $region130: #{tpu_custom_call.1} parent=120 // pred_check
        %p928 = pneg %p927
      $region131: #{tpu_custom_call.1} parent=120 // pred_check_branch
        %930 = sbr.rel (%p928) target = $region133
      $region132: #{tpu_custom_call.1} parent=120 // pred_region
        %v931 = vld [vmem:[#allocation2] sm:$0xff]
        %932 = vst [vmem:[#allocation10] sm:$0xff] %v931
      $region133: #{tpu_custom_call.1} parent=120 // pred_fallthru
        _
    $region121: #{tpu_custom_call.1} parent=1 // pred_fallthru
      _
    %s933 = sadd.s32 %s46, 7
    %p934 = scmp.lt.s32.totalorder %s933, 8
    // Predicated region
    $region134: #{tpu_custom_call.1} parent=1 // pred_check
      %p935 = pneg %p934
    $region135: #{tpu_custom_call.1} parent=1 // pred_check_branch
      %937 = sbr.rel (%p935) target = $region137
    $region136: #{tpu_custom_call.1} parent=1 // pred_region
      %s938 = scalar_lea.vmem [#allocation4], 56
      %v939 = vld [vmem:[%s938] sm:$0xff]
      %p940 = scmp.eq.s32.totalorder %s933, 0
      // Predicated region
      $region138: #{tpu_custom_call.1} parent=136 // pred_check
        %p941 = pneg %p940
      $region139: #{tpu_custom_call.1} parent=136 // pred_check_branch
        %943 = sbr.rel (%p941) target = $region141
      $region140: #{tpu_custom_call.1} parent=136 // pred_region
        %944 = vst [vmem:[#allocation2] sm:$0xff] %v939
      $region141: #{tpu_custom_call.1} parent=136 // pred_fallthru
        _
      %p945 = scmp.gt.s32.totalorder %s933, 0
      // Predicated region
      $region142: #{tpu_custom_call.1} parent=136 // pred_check
        %p946 = pneg %p945
      $region143: #{tpu_custom_call.1} parent=136 // pred_check_branch
        %948 = sbr.rel (%p946) target = $region145
      $region144: #{tpu_custom_call.1} parent=136 // pred_region
        %v949 = vld [vmem:[#allocation3] sm:$0xff]
        %v950 = vld [vmem:[#allocation7] sm:$0xff]
        %v951 = vld [vmem:[#allocation7 + $0x8] sm:$0xff]
        %v952 = vld [vmem:[#allocation7 + $0x10] sm:$0xff]
        %v953 = vld [vmem:[#allocation7 + $0x18] sm:$0xff]
        %v954 = vld [vmem:[#allocation7 + $0x20] sm:$0xff]
        %v955 = vld [vmem:[#allocation7 + $0x28] sm:$0xff]
        %v956 = vld [vmem:[#allocation7 + $0x30] sm:$0xff]
        %v957 = vld [vmem:[#allocation7 + $0x38] sm:$0xff]
        %v958 = vld [vmem:[#allocation7 + $0x40] sm:$0xff]
        %v959 = vld [vmem:[#allocation7 + $0x48] sm:$0xff]
        %v960 = vld [vmem:[#allocation7 + $0x50] sm:$0xff]
        %v961 = vld [vmem:[#allocation7 + $0x58] sm:$0xff]
        %v962 = vld [vmem:[#allocation7 + $0x60] sm:$0xff]
        %v963 = vld [vmem:[#allocation7 + $0x68] sm:$0xff]
        %v964 = vld [vmem:[#allocation7 + $0x70] sm:$0xff]
        %v965 = vld [vmem:[#allocation7 + $0x78] sm:$0xff]
        %v966 = vld [vmem:[%s2] sm:$0x1]
        %v968 = vlaneseq
        %v969 = vshrl.u32 %v968, 7
        %v970 = vsub.s32 0, %v969
        %v971 = vrot.slane %v966, %v970
        %973 = vmatprep.subr.mxu0 0.0
        %974 = vmatpush1.msra.mxu0 %v965
        %975 = vmatprep.subr.mxu0 0.0
        %976 = vmatpush1.msra.mxu0 %v964
        %977 = vmatprep.subr.mxu0 0.0
        %978 = vmatpush1.msra.mxu0 %v963
        %979 = vmatprep.subr.mxu0 0.0
        %980 = vmatpush1.msra.mxu0 %v962
        %981 = vmatprep.subr.mxu0 0.0
        %982 = vmatpush1.msra.mxu0 %v961
        %983 = vmatprep.subr.mxu0 0.0
        %984 = vmatpush1.msra.mxu0 %v960
        %985 = vmatprep.subr.mxu0 0.0
        %986 = vmatpush1.msra.mxu0 %v959
        %987 = vmatprep.subr.mxu0 0.0
        %988 = vmatpush1.msra.mxu0 %v958
        %989 = vmatprep.subr.mxu0 0.0
        %990 = vmatpush1.msra.mxu0 %v957
        %991 = vmatprep.subr.mxu0 0.0
        %992 = vmatpush1.msra.mxu0 %v956
        %993 = vmatprep.subr.mxu0 0.0
        %994 = vmatpush1.msra.mxu0 %v955
        %995 = vmatprep.subr.mxu0 0.0
        %996 = vmatpush1.msra.mxu0 %v954
        %997 = vmatprep.subr.mxu0 0.0
        %998 = vmatpush1.msra.mxu0 %v953
        %999 = vmatprep.subr.mxu0 0.0
        %1000 = vmatpush1.msra.mxu0 %v952
        %1001 = vmatprep.subr.mxu0 0.0
        %1002 = vmatpush1.msra.mxu0 %v951
        %1003 = vmatprep.subr.mxu0 0.0
        %1004 = vmatpush1.msra.mxu0 %v950
        %1005 = vmatprep.subr.mxu0 0.0
        %1006 = vmatpush2.msra.mxu0 0.0
        %1007 = vmatprep.subr.mxu0 0.0
        %1008 = vmatpush2.msra.mxu0 0.0
        %1009 = vmatprep.subr.mxu0 0.0
        %1010 = vmatpush2.msra.mxu0 0.0
        %1011 = vmatprep.subr.mxu0 0.0
        %1012 = vmatpush2.msra.mxu0 0.0
        %1013 = vmatprep.subr.mxu0 0.0
        %1014 = vmatpush2.msra.mxu0 0.0
        %1015 = vmatprep.subr.mxu0 0.0
        %1016 = vmatpush2.msra.mxu0 0.0
        %1017 = vmatprep.subr.mxu0 0.0
        %1018 = vmatpush2.msra.mxu0 0.0
        %1019 = vmatprep.subr.mxu0 0.0
        %1020 = vmatpush2.msra.mxu0 0.0
        %1021 = vmatprep.subr.mxu0 0.0
        %1022 = vmatpush2.msra.mxu0 0.0
        %1023 = vmatprep.subr.mxu0 0.0
        %1024 = vmatpush2.msra.mxu0 0.0
        %1025 = vmatprep.subr.mxu0 0.0
        %1026 = vmatpush2.msra.mxu0 0.0
        %1027 = vmatprep.subr.mxu0 0.0
        %1028 = vmatpush2.msra.mxu0 0.0
        %1029 = vmatprep.subr.mxu0 0.0
        %1030 = vmatpush2.msra.mxu0 0.0
        %1031 = vmatprep.subr.mxu0 0.0
        %1032 = vmatpush2.msra.mxu0 0.0
        %1033 = vmatprep.subr.mxu0 0.0
        %1034 = vmatpush2.msra.mxu0 0.0
        %1035 = vmatprep.subr.mxu0 0.0
        %1036 = vmatpush2.msra.mxu0 0.0
        %1037 = vmatprep.mubr.f32.mxu0 0.0
        %1038 = vmatmul.mubr.f32.gmra.mxu0 %v949
        %v1039 = vpop.f32.mrf.mxu0
        %v1040 = vadd.f32 %v971, %v1039
        %v1041 = vpop.f32.mrf.mxu0
        %1042 = vdwg.mxu0
        %v1043 = vld [vmem:[#allocation2] sm:$0xff]
        %v1044 = vadd.f32 %v939, %v1040
        %v1045 = vsub.f32 %v1044, %v1043
        %v1046 = vmul.f32 %v1045, 0.5
        %v1047 = vadd.f32 %v1043, %v1046
        %1048 = vst [vmem:[#allocation2] sm:$0xff] %v1047
      $region145: #{tpu_custom_call.1} parent=136 // pred_fallthru
        _
      %v1049 = vld [vmem:[#allocation2] sm:$0xff]
      %v1050 = vtanh.pop %v1049
      %1051 = vst [vmem:[#allocation3] sm:$0xff] %v1050
      %s1052 = scalar_lea.vmem [#allocation9], 56
      %1053 = vst [vmem:[%s1052] sm:$0xff] %v1050
      %p1054 = scmp.eq.s32.totalorder %s933, 7
      // Predicated region
      $region146: #{tpu_custom_call.1} parent=136 // pred_check
        %p1055 = pneg %p1054
      $region147: #{tpu_custom_call.1} parent=136 // pred_check_branch
        %1057 = sbr.rel (%p1055) target = $region149
      $region148: #{tpu_custom_call.1} parent=136 // pred_region
        %v1058 = vld [vmem:[#allocation2] sm:$0xff]
        %1059 = vst [vmem:[#allocation10] sm:$0xff] %v1058
      $region149: #{tpu_custom_call.1} parent=136 // pred_fallthru
        _
    $region137: #{tpu_custom_call.1} parent=1 // pred_fallthru
      _
    // Predicated region
    $region150: #{tpu_custom_call.1} parent=1 // pred_check
      _
    $region151: #{tpu_custom_call.1} parent=1 // pred_check_branch
      %1061 = sbr.rel (0) target = $region153
    $region152: #{tpu_custom_call.1} parent=1 // pred_region
      %s1063 = ssub.s32 1024, 1024
      %1064 = vsyncadd [#allocation6], %s1063
      %s1065 = sshll.u32 [#allocation9], 4
      %s1066 = int_to_ptr.vmem [resolvable:$true] %s1065
      %1071 = dma.vmem_to_hbm [thread:$0]  %s1066, 1024, %s3, [#allocation6], 128, 128, 8
    $region153: #{tpu_custom_call.1} parent=1 // pred_fallthru
      _
    // Predicated region
    $region154: #{tpu_custom_call.1} parent=1 // pred_check
      _
    $region155: #{tpu_custom_call.1} parent=1 // pred_check_branch
      %1073 = sbr.rel (0) target = $region157
    $region156: #{tpu_custom_call.1} parent=1 // pred_region
      %s1075 = ssub.s32 128, 128
      %1076 = vsyncadd [#allocation11], %s1075
      %s1078 = sshll.u32 [#allocation10], 4
      %s1079 = int_to_ptr.vmem [resolvable:$true] %s1078
      %1081 = dma.vmem_to_hbm [thread:$0]  %s1079, 128, %s4, [#allocation11]
    $region157: #{tpu_custom_call.1} parent=1 // pred_fallthru
      _
    // Predicated region
    $region158: #{tpu_custom_call.1} parent=1 // pred_check
      _
    $region159: #{tpu_custom_call.1} parent=1 // pred_check_branch
      %1083 = sbr.rel (0) target = $region161
    $region160: #{tpu_custom_call.1} parent=1 // pred_region
      %1084 = dma.done [#allocation6], 1024
    $region161: #{tpu_custom_call.1} parent=1 // pred_fallthru
      _
    // Predicated region
    $region162: #{tpu_custom_call.1} parent=1 // pred_check
      _
    $region163: #{tpu_custom_call.1} parent=1 // pred_check_branch
      %1086 = sbr.rel (0) target = $region165
    $region164: #{tpu_custom_call.1} parent=1 // pred_region
      %1087 = dma.done [#allocation11], 128
    $region165: #{tpu_custom_call.1} parent=1 // pred_fallthru
      _
    %1088 = vsyncpa [#allocation5], 1
    %1089 = vsyncpa [#allocation8], 1
    %1090 = vsyncpa [#allocation6], 1
    %1091 = vsyncpa [#allocation11], 1

</llo_original>
